<compile_context>
chip_gen: v7x
topology: tpu7x:2x2x1
jax: 0.10.0
libtpu: 0.0.40
codegen_flags: <defaults>
</compile_context>

<pallas_src>
import functools

import jax
import jax.numpy as jnp
from jax import lax
from jax.experimental import pallas as pl
from jax.experimental.pallas import tpu as pltpu


def _round_up(n, m):
    return ((n + m - 1) // m) * m


_STATIC_UNROLL_MAX_T = 64


# ----------------------------------------------------------------------------
# Pallas kernel: hoisted input projection + unrolled GRU + 2 dense layers
# ----------------------------------------------------------------------------
def actor_kernel(x_ref, wih_ref, whh_ref, bx_ref, bhn_ref,
                 w2_ref, b2_ref, w3_ref, b3_ref, out_ref,
                 *, hidden_pad, max_action):
    T, B, D = x_ref.shape          # time-major block: (T, bb, D)
    Hp = hidden_pad                # per-gate lane-padded hidden size (mult of 128)
    G = 3 * Hp

    def mm(a, w):
        # Cast activation to the weight dtype (no-op for f32 weights) so bf16
        # weights hit the bf16 MXU path; always accumulate in f32.
        return jnp.dot(a.astype(w.dtype), w, preferred_element_type=jnp.float32)

    # --- hoisted input projection: one MXU matmul for all time steps --------
    # bx already contains b_ih for all gates plus b_hh for the r/z gates.
    gx_all = mm(x_ref[...].reshape(T * B, D), wih_ref[...]) + bx_ref[...]
    gx_all = gx_all.reshape(T, B, G)

    whh = whh_ref[...]                                   # (Hp, 3Hp)
    bhn = jnp.broadcast_to(bhn_ref[...], (B, Hp))        # hoisted broadcast

    def gru_step(gx, h):
        gh = mm(h, whh)
        # fused r/z sigmoid over a lane-aligned 2*Hp slab (one EUP pass)
        rz = jax.nn.sigmoid(gx[:, :2 * Hp] + gh[:, :2 * Hp])
        r = rz[:, :Hp]
        z = rz[:, Hp:]
        n = jnp.tanh(gx[:, 2 * Hp:] + r * (gh[:, 2 * Hp:] + bhn))
        return (1.0 - z) * n + z * h

    h = jnp.zeros((B, Hp), jnp.float32)
    if T <= _STATIC_UNROLL_MAX_T:
        for t in range(T):                               # static unroll
            h = gru_step(gx_all[t], h)
    else:
        def body(t, h_c):
            gx_t = lax.dynamic_index_in_dim(gx_all, t, 0, keepdims=False)
            return gru_step(gx_t, h_c)
        h = lax.fori_loop(0, T, body, h)

    # l2: relu(Linear)
    y = jnp.maximum(mm(h, w2_ref[...]) + b2_ref[...], 0.0)
    # l3: max_action * tanh(Linear)   (lane-dense padded output)
    a = mm(y, w3_ref[...]) + b3_ref[...]
    out_ref[...] = max_action * jnp.tanh(a)


# ----------------------------------------------------------------------------
# Wrapper: padding / layout conversion + pallas_call with a parallel batch grid
# ----------------------------------------------------------------------------
@functools.partial(jax.jit, static_argnums=(2,),
                   static_argnames=("weight_dtype", "batch_block"))
def actor_forward(x, params, max_action, *, weight_dtype=jnp.float32,
                  batch_block=128):
    """x: (B, T, D) batch-first, float32. Returns (B, action_dim).

    weight_dtype=jnp.bfloat16 is recommended on v6e/v7x (keeps f32 accumulation).
    """
    B, T, D = x.shape
    H1 = params["w_hh"].shape[1]          # w_hh: (3*H1, H1)
    H2 = params["w2"].shape[0]            # w2:   (H2, H1)
    A = params["w3"].shape[0]             # w3:   (A, H2)

    f32 = jnp.float32
    Hp = _round_up(H1, 128)               # lane-aligned per-gate width
    H2p = _round_up(H2, 128)
    Ap = _round_up(A, 128)                # lane-dense output

    # Batch block: largest sublane-aligned block (<= batch_block) keeping the
    # resident gx slab (T, bb, 3Hp) f32 under ~8 MiB of VMEM.
    gx_budget = 8 * 1024 * 1024
    bb_cap = max(8, (gx_budget // (T * 3 * Hp * 4)) // 8 * 8)
    bb = min(_round_up(B, 8), batch_block, bb_cap)
    Bp = _round_up(B, bb)

    # --- time-major input, batch padded to the block size --------------------
    # TODO(synk): for very large B*T*D, stream batch-first blocks through a
    # BlockSpec instead of this wrapper-side transpose (one extra pass on x).
    x_tm = jnp.transpose(x.astype(f32), (1, 0, 2))                 # (T, B, D)
    x_tm = jnp.pad(x_tm, ((0, 0), (0, Bp - B), (0, 0)))            # (T, Bp, D)

    # --- gate-packed, lane-padded weights: gate g lives in lanes [g*Hp, g*Hp+H1)
    def pack_gate_weight(w, in_pad):      # w: (3*H1, in_dim) -> (in_pad, 3*Hp)
        in_dim = w.shape[1]
        wg = w.reshape(3, H1, in_dim).astype(f32)
        wg = jnp.pad(wg, ((0, 0), (0, Hp - H1), (0, in_pad - in_dim)))
        return jnp.transpose(wg, (2, 0, 1)).reshape(in_pad, 3 * Hp)

    def pack_gates(b):                    # b: (3*H1,) -> (3, Hp)
        return jnp.pad(b.reshape(3, H1).astype(f32), ((0, 0), (0, Hp - H1)))

    wih_t = pack_gate_weight(params["w_ih"], D).astype(weight_dtype)   # (D, 3Hp)
    whh_t = pack_gate_weight(params["w_hh"], Hp).astype(weight_dtype)  # (Hp, 3Hp)

    bih_g = pack_gates(params["b_ih"])                                 # (3, Hp)
    bhh_g = pack_gates(params["b_hh"])                                 # (3, Hp)
    # Fold the hh-bias of the r/z gates into the input-side bias (valid: those
    # gates see gx + gh with no later scaling).  The n-gate hh bias must stay
    # separate since it is multiplied by r inside the step.
    bx = jnp.concatenate(
        [bih_g[0] + bhh_g[0], bih_g[1] + bhh_g[1], bih_g[2]]).reshape(1, 3 * Hp)
    bhn = bhh_g[2].reshape(1, Hp)

    w2_t = jnp.pad(params["w2"].astype(f32),
                   ((0, H2p - H2), (0, Hp - H1))).T.astype(weight_dtype)  # (Hp, H2p)
    b2 = jnp.pad(params["b2"].astype(f32), (0, H2p - H2)).reshape(1, H2p)
    w3_t = jnp.pad(params["w3"].astype(f32),
                   ((0, Ap - A), (0, H2p - H2))).T.astype(weight_dtype)   # (H2p, Ap)
    b3 = jnp.pad(params["b3"].astype(f32), (0, Ap - A)).reshape(1, Ap)

    kernel = functools.partial(actor_kernel, hidden_pad=Hp,
                               max_action=float(max_action))

    def _full_spec(arr):   # whole array resident every grid step (weights)
        return pl.BlockSpec(arr.shape, lambda i, n=arr.ndim: (0,) * n)

    out_pad = pl.pallas_call(
        kernel,
        out_shape=jax.ShapeDtypeStruct((Bp, Ap), jnp.float32),
        grid=(Bp // bb,),
        in_specs=[
            pl.BlockSpec((T, bb, D), lambda i: (0, i, 0)),     # x (time-major)
            _full_spec(wih_t), _full_spec(whh_t),
            _full_spec(bx), _full_spec(bhn),
            _full_spec(w2_t), _full_spec(b2),
            _full_spec(w3_t), _full_spec(b3),
        ],
        out_specs=pl.BlockSpec((bb, Ap), lambda i: (i, 0)),
        compiler_params=pltpu.CompilerParams(
            dimension_semantics=("parallel",)),
    )(x_tm, wih_t, whh_t, bx, bhn, w2_t, b2, w3_t, b3)

    return out_pad[:B, :A]


# ----------------------------------------------------------------------------
# Pure-JAX reference (mirrors torch.nn.GRU / Linear exactly)
# ----------------------------------------------------------------------------
def actor_reference(x, params, max_action):
    B, T, D = x.shape
    H1 = params["w_hh"].shape[1]
    wih, whh = params["w_ih"], params["w_hh"]
    bih, bhh = params["b_ih"], params["b_hh"]

    def step(h, x_t):
        gx = x_t @ wih.T + bih
        gh = h @ whh.T + bhh
        r = jax.nn.sigmoid(gx[:, :H1] + gh[:, :H1])
        z = jax.nn.sigmoid(gx[:, H1:2 * H1] + gh[:, H1:2 * H1])
        n = jnp.tanh(gx[:, 2 * H1:] + r * gh[:, 2 * H1:])
        h_new = (1.0 - z) * n + z * h
        return h_new, None

    h0 = jnp.zeros((B, H1), jnp.float32)
    h_last, _ = lax.scan(step, h0, jnp.transpose(x, (1, 0, 2)))
    y = jnp.maximum(h_last @ params["w2"].T + params["b2"], 0.0)
    return max_action * jnp.tanh(y @ params["w3"].T + params["b3"])


# ----------------------------------------------------------------------------
# Deterministic parameter init (PyTorch-shaped tensors)
# ----------------------------------------------------------------------------
def init_params(key, state_dim, action_dim, h1, h2):
    ks = jax.random.split(key, 8)
    s1 = 1.0 / jnp.sqrt(h1)
    s2 = 1.0 / jnp.sqrt(h1)
    s3 = 1.0 / jnp.sqrt(h2)
    u = lambda k, shape, s: jax.random.uniform(k, shape, jnp.float32, -s, s)
    return {
        "w_ih": u(ks[0], (3 * h1, state_dim), s1),
        "w_hh": u(ks[1], (3 * h1, h1), s1),
        "b_ih": u(ks[2], (3 * h1,), s1),
        "b_hh": u(ks[3], (3 * h1,), s1),
        "w2":   u(ks[4], (h2, h1), s2),
        "b2":   u(ks[5], (h2,), s2),
        "w3":   u(ks[6], (action_dim, h2), s3),
        "b3":   u(ks[7], (action_dim,), s3),
    }


if __name__ == "__main__":
    # small shapes consistent with the module's forward
    B, T = 2, 8                 # batch, sequence length
    STATE_DIM = 16              # state_dim
    H1, H2 = 32, 32             # l1_hidden_dim, l2_hidden_dim (scaled down)
    ACTION_DIM = 4
    MAX_ACTION = 2.0

    key = jax.random.PRNGKey(0)
    k_x, k_p = jax.random.split(key)
    x = jax.random.normal(k_x, (B, T, STATE_DIM), jnp.float32)
    params = init_params(k_p, STATE_DIM, ACTION_DIM, H1, H2)

    out = jax.block_until_ready(actor_forward(x, params, MAX_ACTION))
    ref = jax.block_until_ready(actor_reference(x, params, MAX_ACTION))

    assert out.shape == (B, ACTION_DIM)
    assert jnp.allclose(out, ref, atol=1e-3, rtol=1e-3), (out, ref)

    print("KERNEL_OK")
</pallas_src>

<mosaic_0001>
module attributes {stable_mosaic.version = 11 : i64} {
  func.func @actor_kernel(%arg0: i32, %arg1: memref<8x8x16xf32, #tpu.memory_space<vmem>>, %arg2: memref<16x384xf32, #tpu.memory_space<vmem>>, %arg3: memref<128x384xf32, #tpu.memory_space<vmem>>, %arg4: memref<1x384xf32, #tpu.memory_space<vmem>>, %arg5: memref<1x128xf32, #tpu.memory_space<vmem>>, %arg6: memref<128x128xf32, #tpu.memory_space<vmem>>, %arg7: memref<1x128xf32, #tpu.memory_space<vmem>>, %arg8: memref<128x128xf32, #tpu.memory_space<vmem>>, %arg9: memref<1x128xf32, #tpu.memory_space<vmem>>, %arg10: memref<8x128xf32, #tpu.memory_space<vmem>>) attributes {dimension_semantics = [#tpu.dimension_semantics<parallel>], iteration_bounds = array<i64: 1>, scalar_prefetch = 0 : i64, scratch_operands = 0 : i64, tpu.core_type = #tpu.core_type<tc>, window_params = [{transform_indices = @transform_0, window_bounds = array<i64: 8, 8, 16>}, {pipeline_mode = #tpu.pipeline_mode<synchronous>, transform_indices = @transform_1, window_bounds = array<i64: 16, 384>}, {pipeline_mode = #tpu.pipeline_mode<synchronous>, transform_indices = @transform_2, window_bounds = array<i64: 128, 384>}, {pipeline_mode = #tpu.pipeline_mode<synchronous>, transform_indices = @transform_3, window_bounds = array<i64: 1, 384>}, {pipeline_mode = #tpu.pipeline_mode<synchronous>, transform_indices = @transform_4, window_bounds = array<i64: 1, 128>}, {pipeline_mode = #tpu.pipeline_mode<synchronous>, transform_indices = @transform_5, window_bounds = array<i64: 128, 128>}, {pipeline_mode = #tpu.pipeline_mode<synchronous>, transform_indices = @transform_6, window_bounds = array<i64: 1, 128>}, {pipeline_mode = #tpu.pipeline_mode<synchronous>, transform_indices = @transform_7, window_bounds = array<i64: 128, 128>}, {pipeline_mode = #tpu.pipeline_mode<synchronous>, transform_indices = @transform_8, window_bounds = array<i64: 1, 128>}, {transform_indices = @transform_9, window_bounds = array<i64: 8, 128>}]} {
    %c0 = arith.constant 0 : index
    %c0_0 = arith.constant 0 : index
    %c0_1 = arith.constant 0 : index
    %0 = vector.load %arg1[%c0, %c0_0, %c0_1] : memref<8x8x16xf32, #tpu.memory_space<vmem>>, vector<8x8x16xf32>
    %1 = vector.shape_cast %0 : vector<8x8x16xf32> to vector<64x16xf32>
    %c0_2 = arith.constant 0 : index
    %c0_3 = arith.constant 0 : index
    %2 = vector.load %arg2[%c0_2, %c0_3] : memref<16x384xf32, #tpu.memory_space<vmem>>, vector<16x384xf32>
    %cst = arith.constant dense<0.000000e+00> : vector<64x384xf32>
    %3 = tpu.matmul %1, %2, %cst {dimension_numbers = #tpu.dot_dimension_numbers<[1], [0], [0], [1], [0, 0, 1, 1], [], []>} : vector<64x16xf32>, vector<16x384xf32>, vector<64x384xf32> -> vector<64x384xf32>
    %c0_4 = arith.constant 0 : index
    %c0_5 = arith.constant 0 : index
    %4 = vector.load %arg4[%c0_4, %c0_5] : memref<1x384xf32, #tpu.memory_space<vmem>>, vector<1x384xf32>
    %5 = vector.broadcast %4 : vector<1x384xf32> to vector<64x384xf32>
    %6 = arith.addf %3, %5 : vector<64x384xf32>
    %7 = vector.shape_cast %6 : vector<64x384xf32> to vector<8x8x384xf32>
    %c0_6 = arith.constant 0 : index
    %c0_7 = arith.constant 0 : index
    %8 = vector.load %arg3[%c0_6, %c0_7] : memref<128x384xf32, #tpu.memory_space<vmem>>, vector<128x384xf32>
    %c0_8 = arith.constant 0 : index
    %c0_9 = arith.constant 0 : index
    %9 = vector.load %arg5[%c0_8, %c0_9] : memref<1x128xf32, #tpu.memory_space<vmem>>, vector<1x128xf32>
    %10 = vector.shape_cast %9 : vector<1x128xf32> to vector<1x128xf32>
    %11 = vector.broadcast %10 : vector<1x128xf32> to vector<8x128xf32>
    %cst_10 = arith.constant 0.000000e+00 : f32
    %12 = vector.broadcast %cst_10 : f32 to vector<8x128xf32>
    %13 = vector.extract_strided_slice %7 {offsets = [0, 0, 0], sizes = [1, 8, 384], strides = [1, 1, 1]} : vector<8x8x384xf32> to vector<1x8x384xf32>
    %14 = vector.shape_cast %13 : vector<1x8x384xf32> to vector<8x384xf32>
    %cst_11 = arith.constant dense<0.000000e+00> : vector<8x384xf32>
    %15 = tpu.matmul %12, %8, %cst_11 {dimension_numbers = #tpu.dot_dimension_numbers<[1], [0], [0], [1], [0, 0, 1, 1], [], []>} : vector<8x128xf32>, vector<128x384xf32>, vector<8x384xf32> -> vector<8x384xf32>
    %16 = vector.extract_strided_slice %14 {offsets = [0, 0], sizes = [8, 256], strides = [1, 1]} : vector<8x384xf32> to vector<8x256xf32>
    %17 = vector.extract_strided_slice %15 {offsets = [0, 0], sizes = [8, 256], strides = [1, 1]} : vector<8x384xf32> to vector<8x256xf32>
    %18 = arith.addf %16, %17 : vector<8x256xf32>
    %19 = arith.negf %18 : vector<8x256xf32>
    %20 = math.exp %19 : vector<8x256xf32>
    %cst_12 = arith.constant 1.000000e+00 : f32
    %21 = vector.broadcast %cst_12 : f32 to vector<8x256xf32>
    %22 = arith.addf %21, %20 : vector<8x256xf32>
    %23 = arith.divf %21, %22 : vector<8x256xf32>
    %24 = vector.extract_strided_slice %23 {offsets = [0, 0], sizes = [8, 128], strides = [1, 1]} : vector<8x256xf32> to vector<8x128xf32>
    %25 = vector.extract_strided_slice %23 {offsets = [0, 128], sizes = [8, 128], strides = [1, 1]} : vector<8x256xf32> to vector<8x128xf32>
    %26 = vector.extract_strided_slice %14 {offsets = [0, 256], sizes = [8, 128], strides = [1, 1]} : vector<8x384xf32> to vector<8x128xf32>
    %27 = vector.extract_strided_slice %15 {offsets = [0, 256], sizes = [8, 128], strides = [1, 1]} : vector<8x384xf32> to vector<8x128xf32>
    %28 = arith.addf %27, %11 : vector<8x128xf32>
    %29 = arith.mulf %24, %28 : vector<8x128xf32>
    %30 = arith.addf %26, %29 : vector<8x128xf32>
    %31 = math.tanh %30 : vector<8x128xf32>
    %cst_13 = arith.constant 1.000000e+00 : f32
    %32 = vector.broadcast %cst_13 : f32 to vector<8x128xf32>
    %33 = arith.subf %32, %25 : vector<8x128xf32>
    %34 = arith.mulf %33, %31 : vector<8x128xf32>
    %35 = arith.mulf %25, %12 : vector<8x128xf32>
    %36 = arith.addf %34, %35 : vector<8x128xf32>
    %37 = vector.extract_strided_slice %7 {offsets = [1, 0, 0], sizes = [1, 8, 384], strides = [1, 1, 1]} : vector<8x8x384xf32> to vector<1x8x384xf32>
    %38 = vector.shape_cast %37 : vector<1x8x384xf32> to vector<8x384xf32>
    %cst_14 = arith.constant dense<0.000000e+00> : vector<8x384xf32>
    %39 = tpu.matmul %36, %8, %cst_14 {dimension_numbers = #tpu.dot_dimension_numbers<[1], [0], [0], [1], [0, 0, 1, 1], [], []>} : vector<8x128xf32>, vector<128x384xf32>, vector<8x384xf32> -> vector<8x384xf32>
    %40 = vector.extract_strided_slice %38 {offsets = [0, 0], sizes = [8, 256], strides = [1, 1]} : vector<8x384xf32> to vector<8x256xf32>
    %41 = vector.extract_strided_slice %39 {offsets = [0, 0], sizes = [8, 256], strides = [1, 1]} : vector<8x384xf32> to vector<8x256xf32>
    %42 = arith.addf %40, %41 : vector<8x256xf32>
    %43 = arith.negf %42 : vector<8x256xf32>
    %44 = math.exp %43 : vector<8x256xf32>
    %cst_15 = arith.constant 1.000000e+00 : f32
    %45 = vector.broadcast %cst_15 : f32 to vector<8x256xf32>
    %46 = arith.addf %45, %44 : vector<8x256xf32>
    %47 = arith.divf %45, %46 : vector<8x256xf32>
    %48 = vector.extract_strided_slice %47 {offsets = [0, 0], sizes = [8, 128], strides = [1, 1]} : vector<8x256xf32> to vector<8x128xf32>
    %49 = vector.extract_strided_slice %47 {offsets = [0, 128], sizes = [8, 128], strides = [1, 1]} : vector<8x256xf32> to vector<8x128xf32>
    %50 = vector.extract_strided_slice %38 {offsets = [0, 256], sizes = [8, 128], strides = [1, 1]} : vector<8x384xf32> to vector<8x128xf32>
    %51 = vector.extract_strided_slice %39 {offsets = [0, 256], sizes = [8, 128], strides = [1, 1]} : vector<8x384xf32> to vector<8x128xf32>
    %52 = arith.addf %51, %11 : vector<8x128xf32>
    %53 = arith.mulf %48, %52 : vector<8x128xf32>
    %54 = arith.addf %50, %53 : vector<8x128xf32>
    %55 = math.tanh %54 : vector<8x128xf32>
    %cst_16 = arith.constant 1.000000e+00 : f32
    %56 = vector.broadcast %cst_16 : f32 to vector<8x128xf32>
    %57 = arith.subf %56, %49 : vector<8x128xf32>
    %58 = arith.mulf %57, %55 : vector<8x128xf32>
    %59 = arith.mulf %49, %36 : vector<8x128xf32>
    %60 = arith.addf %58, %59 : vector<8x128xf32>
    %61 = vector.extract_strided_slice %7 {offsets = [2, 0, 0], sizes = [1, 8, 384], strides = [1, 1, 1]} : vector<8x8x384xf32> to vector<1x8x384xf32>
    %62 = vector.shape_cast %61 : vector<1x8x384xf32> to vector<8x384xf32>
    %cst_17 = arith.constant dense<0.000000e+00> : vector<8x384xf32>
    %63 = tpu.matmul %60, %8, %cst_17 {dimension_numbers = #tpu.dot_dimension_numbers<[1], [0], [0], [1], [0, 0, 1, 1], [], []>} : vector<8x128xf32>, vector<128x384xf32>, vector<8x384xf32> -> vector<8x384xf32>
    %64 = vector.extract_strided_slice %62 {offsets = [0, 0], sizes = [8, 256], strides = [1, 1]} : vector<8x384xf32> to vector<8x256xf32>
    %65 = vector.extract_strided_slice %63 {offsets = [0, 0], sizes = [8, 256], strides = [1, 1]} : vector<8x384xf32> to vector<8x256xf32>
    %66 = arith.addf %64, %65 : vector<8x256xf32>
    %67 = arith.negf %66 : vector<8x256xf32>
    %68 = math.exp %67 : vector<8x256xf32>
    %cst_18 = arith.constant 1.000000e+00 : f32
    %69 = vector.broadcast %cst_18 : f32 to vector<8x256xf32>
    %70 = arith.addf %69, %68 : vector<8x256xf32>
    %71 = arith.divf %69, %70 : vector<8x256xf32>
    %72 = vector.extract_strided_slice %71 {offsets = [0, 0], sizes = [8, 128], strides = [1, 1]} : vector<8x256xf32> to vector<8x128xf32>
    %73 = vector.extract_strided_slice %71 {offsets = [0, 128], sizes = [8, 128], strides = [1, 1]} : vector<8x256xf32> to vector<8x128xf32>
    %74 = vector.extract_strided_slice %62 {offsets = [0, 256], sizes = [8, 128], strides = [1, 1]} : vector<8x384xf32> to vector<8x128xf32>
    %75 = vector.extract_strided_slice %63 {offsets = [0, 256], sizes = [8, 128], strides = [1, 1]} : vector<8x384xf32> to vector<8x128xf32>
    %76 = arith.addf %75, %11 : vector<8x128xf32>
    %77 = arith.mulf %72, %76 : vector<8x128xf32>
    %78 = arith.addf %74, %77 : vector<8x128xf32>
    %79 = math.tanh %78 : vector<8x128xf32>
    %cst_19 = arith.constant 1.000000e+00 : f32
    %80 = vector.broadcast %cst_19 : f32 to vector<8x128xf32>
    %81 = arith.subf %80, %73 : vector<8x128xf32>
    %82 = arith.mulf %81, %79 : vector<8x128xf32>
    %83 = arith.mulf %73, %60 : vector<8x128xf32>
    %84 = arith.addf %82, %83 : vector<8x128xf32>
    %85 = vector.extract_strided_slice %7 {offsets = [3, 0, 0], sizes = [1, 8, 384], strides = [1, 1, 1]} : vector<8x8x384xf32> to vector<1x8x384xf32>
    %86 = vector.shape_cast %85 : vector<1x8x384xf32> to vector<8x384xf32>
    %cst_20 = arith.constant dense<0.000000e+00> : vector<8x384xf32>
    %87 = tpu.matmul %84, %8, %cst_20 {dimension_numbers = #tpu.dot_dimension_numbers<[1], [0], [0], [1], [0, 0, 1, 1], [], []>} : vector<8x128xf32>, vector<128x384xf32>, vector<8x384xf32> -> vector<8x384xf32>
    %88 = vector.extract_strided_slice %86 {offsets = [0, 0], sizes = [8, 256], strides = [1, 1]} : vector<8x384xf32> to vector<8x256xf32>
    %89 = vector.extract_strided_slice %87 {offsets = [0, 0], sizes = [8, 256], strides = [1, 1]} : vector<8x384xf32> to vector<8x256xf32>
    %90 = arith.addf %88, %89 : vector<8x256xf32>
    %91 = arith.negf %90 : vector<8x256xf32>
    %92 = math.exp %91 : vector<8x256xf32>
    %cst_21 = arith.constant 1.000000e+00 : f32
    %93 = vector.broadcast %cst_21 : f32 to vector<8x256xf32>
    %94 = arith.addf %93, %92 : vector<8x256xf32>
    %95 = arith.divf %93, %94 : vector<8x256xf32>
    %96 = vector.extract_strided_slice %95 {offsets = [0, 0], sizes = [8, 128], strides = [1, 1]} : vector<8x256xf32> to vector<8x128xf32>
    %97 = vector.extract_strided_slice %95 {offsets = [0, 128], sizes = [8, 128], strides = [1, 1]} : vector<8x256xf32> to vector<8x128xf32>
    %98 = vector.extract_strided_slice %86 {offsets = [0, 256], sizes = [8, 128], strides = [1, 1]} : vector<8x384xf32> to vector<8x128xf32>
    %99 = vector.extract_strided_slice %87 {offsets = [0, 256], sizes = [8, 128], strides = [1, 1]} : vector<8x384xf32> to vector<8x128xf32>
    %100 = arith.addf %99, %11 : vector<8x128xf32>
    %101 = arith.mulf %96, %100 : vector<8x128xf32>
    %102 = arith.addf %98, %101 : vector<8x128xf32>
    %103 = math.tanh %102 : vector<8x128xf32>
    %cst_22 = arith.constant 1.000000e+00 : f32
    %104 = vector.broadcast %cst_22 : f32 to vector<8x128xf32>
    %105 = arith.subf %104, %97 : vector<8x128xf32>
    %106 = arith.mulf %105, %103 : vector<8x128xf32>
    %107 = arith.mulf %97, %84 : vector<8x128xf32>
    %108 = arith.addf %106, %107 : vector<8x128xf32>
    %109 = vector.extract_strided_slice %7 {offsets = [4, 0, 0], sizes = [1, 8, 384], strides = [1, 1, 1]} : vector<8x8x384xf32> to vector<1x8x384xf32>
    %110 = vector.shape_cast %109 : vector<1x8x384xf32> to vector<8x384xf32>
    %cst_23 = arith.constant dense<0.000000e+00> : vector<8x384xf32>
    %111 = tpu.matmul %108, %8, %cst_23 {dimension_numbers = #tpu.dot_dimension_numbers<[1], [0], [0], [1], [0, 0, 1, 1], [], []>} : vector<8x128xf32>, vector<128x384xf32>, vector<8x384xf32> -> vector<8x384xf32>
    %112 = vector.extract_strided_slice %110 {offsets = [0, 0], sizes = [8, 256], strides = [1, 1]} : vector<8x384xf32> to vector<8x256xf32>
    %113 = vector.extract_strided_slice %111 {offsets = [0, 0], sizes = [8, 256], strides = [1, 1]} : vector<8x384xf32> to vector<8x256xf32>
    %114 = arith.addf %112, %113 : vector<8x256xf32>
    %115 = arith.negf %114 : vector<8x256xf32>
    %116 = math.exp %115 : vector<8x256xf32>
    %cst_24 = arith.constant 1.000000e+00 : f32
    %117 = vector.broadcast %cst_24 : f32 to vector<8x256xf32>
    %118 = arith.addf %117, %116 : vector<8x256xf32>
    %119 = arith.divf %117, %118 : vector<8x256xf32>
    %120 = vector.extract_strided_slice %119 {offsets = [0, 0], sizes = [8, 128], strides = [1, 1]} : vector<8x256xf32> to vector<8x128xf32>
    %121 = vector.extract_strided_slice %119 {offsets = [0, 128], sizes = [8, 128], strides = [1, 1]} : vector<8x256xf32> to vector<8x128xf32>
    %122 = vector.extract_strided_slice %110 {offsets = [0, 256], sizes = [8, 128], strides = [1, 1]} : vector<8x384xf32> to vector<8x128xf32>
    %123 = vector.extract_strided_slice %111 {offsets = [0, 256], sizes = [8, 128], strides = [1, 1]} : vector<8x384xf32> to vector<8x128xf32>
    %124 = arith.addf %123, %11 : vector<8x128xf32>
    %125 = arith.mulf %120, %124 : vector<8x128xf32>
    %126 = arith.addf %122, %125 : vector<8x128xf32>
    %127 = math.tanh %126 : vector<8x128xf32>
    %cst_25 = arith.constant 1.000000e+00 : f32
    %128 = vector.broadcast %cst_25 : f32 to vector<8x128xf32>
    %129 = arith.subf %128, %121 : vector<8x128xf32>
    %130 = arith.mulf %129, %127 : vector<8x128xf32>
    %131 = arith.mulf %121, %108 : vector<8x128xf32>
    %132 = arith.addf %130, %131 : vector<8x128xf32>
    %133 = vector.extract_strided_slice %7 {offsets = [5, 0, 0], sizes = [1, 8, 384], strides = [1, 1, 1]} : vector<8x8x384xf32> to vector<1x8x384xf32>
    %134 = vector.shape_cast %133 : vector<1x8x384xf32> to vector<8x384xf32>
    %cst_26 = arith.constant dense<0.000000e+00> : vector<8x384xf32>
    %135 = tpu.matmul %132, %8, %cst_26 {dimension_numbers = #tpu.dot_dimension_numbers<[1], [0], [0], [1], [0, 0, 1, 1], [], []>} : vector<8x128xf32>, vector<128x384xf32>, vector<8x384xf32> -> vector<8x384xf32>
    %136 = vector.extract_strided_slice %134 {offsets = [0, 0], sizes = [8, 256], strides = [1, 1]} : vector<8x384xf32> to vector<8x256xf32>
    %137 = vector.extract_strided_slice %135 {offsets = [0, 0], sizes = [8, 256], strides = [1, 1]} : vector<8x384xf32> to vector<8x256xf32>
    %138 = arith.addf %136, %137 : vector<8x256xf32>
    %139 = arith.negf %138 : vector<8x256xf32>
    %140 = math.exp %139 : vector<8x256xf32>
    %cst_27 = arith.constant 1.000000e+00 : f32
    %141 = vector.broadcast %cst_27 : f32 to vector<8x256xf32>
    %142 = arith.addf %141, %140 : vector<8x256xf32>
    %143 = arith.divf %141, %142 : vector<8x256xf32>
    %144 = vector.extract_strided_slice %143 {offsets = [0, 0], sizes = [8, 128], strides = [1, 1]} : vector<8x256xf32> to vector<8x128xf32>
    %145 = vector.extract_strided_slice %143 {offsets = [0, 128], sizes = [8, 128], strides = [1, 1]} : vector<8x256xf32> to vector<8x128xf32>
    %146 = vector.extract_strided_slice %134 {offsets = [0, 256], sizes = [8, 128], strides = [1, 1]} : vector<8x384xf32> to vector<8x128xf32>
    %147 = vector.extract_strided_slice %135 {offsets = [0, 256], sizes = [8, 128], strides = [1, 1]} : vector<8x384xf32> to vector<8x128xf32>
    %148 = arith.addf %147, %11 : vector<8x128xf32>
    %149 = arith.mulf %144, %148 : vector<8x128xf32>
    %150 = arith.addf %146, %149 : vector<8x128xf32>
    %151 = math.tanh %150 : vector<8x128xf32>
    %cst_28 = arith.constant 1.000000e+00 : f32
    %152 = vector.broadcast %cst_28 : f32 to vector<8x128xf32>
    %153 = arith.subf %152, %145 : vector<8x128xf32>
    %154 = arith.mulf %153, %151 : vector<8x128xf32>
    %155 = arith.mulf %145, %132 : vector<8x128xf32>
    %156 = arith.addf %154, %155 : vector<8x128xf32>
    %157 = vector.extract_strided_slice %7 {offsets = [6, 0, 0], sizes = [1, 8, 384], strides = [1, 1, 1]} : vector<8x8x384xf32> to vector<1x8x384xf32>
    %158 = vector.shape_cast %157 : vector<1x8x384xf32> to vector<8x384xf32>
    %cst_29 = arith.constant dense<0.000000e+00> : vector<8x384xf32>
    %159 = tpu.matmul %156, %8, %cst_29 {dimension_numbers = #tpu.dot_dimension_numbers<[1], [0], [0], [1], [0, 0, 1, 1], [], []>} : vector<8x128xf32>, vector<128x384xf32>, vector<8x384xf32> -> vector<8x384xf32>
    %160 = vector.extract_strided_slice %158 {offsets = [0, 0], sizes = [8, 256], strides = [1, 1]} : vector<8x384xf32> to vector<8x256xf32>
    %161 = vector.extract_strided_slice %159 {offsets = [0, 0], sizes = [8, 256], strides = [1, 1]} : vector<8x384xf32> to vector<8x256xf32>
    %162 = arith.addf %160, %161 : vector<8x256xf32>
    %163 = arith.negf %162 : vector<8x256xf32>
    %164 = math.exp %163 : vector<8x256xf32>
    %cst_30 = arith.constant 1.000000e+00 : f32
    %165 = vector.broadcast %cst_30 : f32 to vector<8x256xf32>
    %166 = arith.addf %165, %164 : vector<8x256xf32>
    %167 = arith.divf %165, %166 : vector<8x256xf32>
    %168 = vector.extract_strided_slice %167 {offsets = [0, 0], sizes = [8, 128], strides = [1, 1]} : vector<8x256xf32> to vector<8x128xf32>
    %169 = vector.extract_strided_slice %167 {offsets = [0, 128], sizes = [8, 128], strides = [1, 1]} : vector<8x256xf32> to vector<8x128xf32>
    %170 = vector.extract_strided_slice %158 {offsets = [0, 256], sizes = [8, 128], strides = [1, 1]} : vector<8x384xf32> to vector<8x128xf32>
    %171 = vector.extract_strided_slice %159 {offsets = [0, 256], sizes = [8, 128], strides = [1, 1]} : vector<8x384xf32> to vector<8x128xf32>
    %172 = arith.addf %171, %11 : vector<8x128xf32>
    %173 = arith.mulf %168, %172 : vector<8x128xf32>
    %174 = arith.addf %170, %173 : vector<8x128xf32>
    %175 = math.tanh %174 : vector<8x128xf32>
    %cst_31 = arith.constant 1.000000e+00 : f32
    %176 = vector.broadcast %cst_31 : f32 to vector<8x128xf32>
    %177 = arith.subf %176, %169 : vector<8x128xf32>
    %178 = arith.mulf %177, %175 : vector<8x128xf32>
    %179 = arith.mulf %169, %156 : vector<8x128xf32>
    %180 = arith.addf %178, %179 : vector<8x128xf32>
    %181 = vector.extract_strided_slice %7 {offsets = [7, 0, 0], sizes = [1, 8, 384], strides = [1, 1, 1]} : vector<8x8x384xf32> to vector<1x8x384xf32>
    %182 = vector.shape_cast %181 : vector<1x8x384xf32> to vector<8x384xf32>
    %cst_32 = arith.constant dense<0.000000e+00> : vector<8x384xf32>
    %183 = tpu.matmul %180, %8, %cst_32 {dimension_numbers = #tpu.dot_dimension_numbers<[1], [0], [0], [1], [0, 0, 1, 1], [], []>} : vector<8x128xf32>, vector<128x384xf32>, vector<8x384xf32> -> vector<8x384xf32>
    %184 = vector.extract_strided_slice %182 {offsets = [0, 0], sizes = [8, 256], strides = [1, 1]} : vector<8x384xf32> to vector<8x256xf32>
    %185 = vector.extract_strided_slice %183 {offsets = [0, 0], sizes = [8, 256], strides = [1, 1]} : vector<8x384xf32> to vector<8x256xf32>
    %186 = arith.addf %184, %185 : vector<8x256xf32>
    %187 = arith.negf %186 : vector<8x256xf32>
    %188 = math.exp %187 : vector<8x256xf32>
    %cst_33 = arith.constant 1.000000e+00 : f32
    %189 = vector.broadcast %cst_33 : f32 to vector<8x256xf32>
    %190 = arith.addf %189, %188 : vector<8x256xf32>
    %191 = arith.divf %189, %190 : vector<8x256xf32>
    %192 = vector.extract_strided_slice %191 {offsets = [0, 0], sizes = [8, 128], strides = [1, 1]} : vector<8x256xf32> to vector<8x128xf32>
    %193 = vector.extract_strided_slice %191 {offsets = [0, 128], sizes = [8, 128], strides = [1, 1]} : vector<8x256xf32> to vector<8x128xf32>
    %194 = vector.extract_strided_slice %182 {offsets = [0, 256], sizes = [8, 128], strides = [1, 1]} : vector<8x384xf32> to vector<8x128xf32>
    %195 = vector.extract_strided_slice %183 {offsets = [0, 256], sizes = [8, 128], strides = [1, 1]} : vector<8x384xf32> to vector<8x128xf32>
    %196 = arith.addf %195, %11 : vector<8x128xf32>
    %197 = arith.mulf %192, %196 : vector<8x128xf32>
    %198 = arith.addf %194, %197 : vector<8x128xf32>
    %199 = math.tanh %198 : vector<8x128xf32>
    %cst_34 = arith.constant 1.000000e+00 : f32
    %200 = vector.broadcast %cst_34 : f32 to vector<8x128xf32>
    %201 = arith.subf %200, %193 : vector<8x128xf32>
    %202 = arith.mulf %201, %199 : vector<8x128xf32>
    %203 = arith.mulf %193, %180 : vector<8x128xf32>
    %204 = arith.addf %202, %203 : vector<8x128xf32>
    %c0_35 = arith.constant 0 : index
    %c0_36 = arith.constant 0 : index
    %205 = vector.load %arg6[%c0_35, %c0_36] : memref<128x128xf32, #tpu.memory_space<vmem>>, vector<128x128xf32>
    %cst_37 = arith.constant dense<0.000000e+00> : vector<8x128xf32>
    %206 = tpu.matmul %204, %205, %cst_37 {dimension_numbers = #tpu.dot_dimension_numbers<[1], [0], [0], [1], [0, 0, 1, 1], [], []>} : vector<8x128xf32>, vector<128x128xf32>, vector<8x128xf32> -> vector<8x128xf32>
    %c0_38 = arith.constant 0 : index
    %c0_39 = arith.constant 0 : index
    %207 = vector.load %arg7[%c0_38, %c0_39] : memref<1x128xf32, #tpu.memory_space<vmem>>, vector<1x128xf32>
    %208 = vector.broadcast %207 : vector<1x128xf32> to vector<8x128xf32>
    %209 = arith.addf %206, %208 : vector<8x128xf32>
    %cst_40 = arith.constant 0.000000e+00 : f32
    %210 = vector.broadcast %cst_40 : f32 to vector<8x128xf32>
    %211 = arith.maximumf %209, %210 : vector<8x128xf32>
    %c0_41 = arith.constant 0 : index
    %c0_42 = arith.constant 0 : index
    %212 = vector.load %arg8[%c0_41, %c0_42] : memref<128x128xf32, #tpu.memory_space<vmem>>, vector<128x128xf32>
    %cst_43 = arith.constant dense<0.000000e+00> : vector<8x128xf32>
    %213 = tpu.matmul %211, %212, %cst_43 {dimension_numbers = #tpu.dot_dimension_numbers<[1], [0], [0], [1], [0, 0, 1, 1], [], []>} : vector<8x128xf32>, vector<128x128xf32>, vector<8x128xf32> -> vector<8x128xf32>
    %c0_44 = arith.constant 0 : index
    %c0_45 = arith.constant 0 : index
    %214 = vector.load %arg9[%c0_44, %c0_45] : memref<1x128xf32, #tpu.memory_space<vmem>>, vector<1x128xf32>
    %215 = vector.broadcast %214 : vector<1x128xf32> to vector<8x128xf32>
    %216 = arith.addf %213, %215 : vector<8x128xf32>
    %217 = math.tanh %216 : vector<8x128xf32>
    %cst_46 = arith.constant 2.000000e+00 : f32
    %218 = vector.broadcast %cst_46 : f32 to vector<8x128xf32>
    %219 = arith.mulf %218, %217 : vector<8x128xf32>
    %c0_47 = arith.constant 0 : index
    %c0_48 = arith.constant 0 : index
    %220 = vector.load %arg10[%c0_47, %c0_48] : memref<8x128xf32, #tpu.memory_space<vmem>>, vector<8x128xf32>
    tpu.vector_store %arg10[%c0_47, %c0_48], %219 {strides = array<i32>} : memref<8x128xf32, #tpu.memory_space<vmem>>, vector<8x128xf32>,
    return
  }
  func.func @transform_0(%arg0: i32) -> (i32, i32, i32) {
    %c0_i32 = arith.constant 0 : i32
    %c0_i32_0 = arith.constant 0 : i32
    %c0_i32_1 = arith.constant 0 : i32
    return %c0_i32, %arg0, %c0_i32_0 : i32, i32, i32
  }
  func.func @transform_1(%arg0: i32) -> (i32, i32) {
    %c0_i32 = arith.constant 0 : i32
    %c0_i32_0 = arith.constant 0 : i32
    %c0_i32_1 = arith.constant 0 : i32
    return %c0_i32, %c0_i32_0 : i32, i32
  }
  func.func @transform_2(%arg0: i32) -> (i32, i32) {
    %c0_i32 = arith.constant 0 : i32
    %c0_i32_0 = arith.constant 0 : i32
    %c0_i32_1 = arith.constant 0 : i32
    return %c0_i32, %c0_i32_0 : i32, i32
  }
  func.func @transform_3(%arg0: i32) -> (i32, i32) {
    %c0_i32 = arith.constant 0 : i32
    %c0_i32_0 = arith.constant 0 : i32
    %c0_i32_1 = arith.constant 0 : i32
    return %c0_i32, %c0_i32_0 : i32, i32
  }
  func.func @transform_4(%arg0: i32) -> (i32, i32) {
    %c0_i32 = arith.constant 0 : i32
    %c0_i32_0 = arith.constant 0 : i32
    %c0_i32_1 = arith.constant 0 : i32
    return %c0_i32, %c0_i32_0 : i32, i32
  }
  func.func @transform_5(%arg0: i32) -> (i32, i32) {
    %c0_i32 = arith.constant 0 : i32
    %c0_i32_0 = arith.constant 0 : i32
    %c0_i32_1 = arith.constant 0 : i32
    return %c0_i32, %c0_i32_0 : i32, i32
  }
  func.func @transform_6(%arg0: i32) -> (i32, i32) {
    %c0_i32 = arith.constant 0 : i32
    %c0_i32_0 = arith.constant 0 : i32
    %c0_i32_1 = arith.constant 0 : i32
    return %c0_i32, %c0_i32_0 : i32, i32
  }
  func.func @transform_7(%arg0: i32) -> (i32, i32) {
    %c0_i32 = arith.constant 0 : i32
    %c0_i32_0 = arith.constant 0 : i32
    %c0_i32_1 = arith.constant 0 : i32
    return %c0_i32, %c0_i32_0 : i32, i32
  }
  func.func @transform_8(%arg0: i32) -> (i32, i32) {
    %c0_i32 = arith.constant 0 : i32
    %c0_i32_0 = arith.constant 0 : i32
    %c0_i32_1 = arith.constant 0 : i32
    return %c0_i32, %c0_i32_0 : i32, i32
  }
  func.func @transform_9(%arg0: i32) -> (i32, i32) {
    %c0_i32 = arith.constant 0 : i32
    %c0_i32_0 = arith.constant 0 : i32
    return %arg0, %c0_i32 : i32, i32
  }
}

</mosaic_0001>

<llo_original>
// kernel: actor_forward.1
$region0: #{actor_forward.1}
  #allocation0 [shape = 'u32[]', space=smem, size = 0x4, offset = 0x4, fixed_abs, tag = 'smem constant byte address 0x4 - core index']
  #allocation1 [shape = 'u32[144,128]{1,0:T(1,128)}', space=vmem, size = 0x12000, scoped, tag = 'internal scratch']
  %s0 = inlined_call_operand.vmem [shape: f32[8,8,16], index: 0, kind: input, shape index: {}]
  %s1 = inlined_call_operand.vmem [shape: f32[16,384], index: 1, kind: input, shape index: {}]
  %s2 = inlined_call_operand.vmem [shape: f32[128,384], index: 2, kind: input, shape index: {}]
  %s3 = inlined_call_operand.vmem [shape: f32[1,384], index: 3, kind: input, shape index: {}]
  %s4 = inlined_call_operand.vmem [shape: f32[1,128], index: 4, kind: input, shape index: {}]
  %s5 = inlined_call_operand.vmem [shape: f32[128,128], index: 5, kind: input, shape index: {}]
  %s6 = inlined_call_operand.vmem [shape: f32[1,128], index: 6, kind: input, shape index: {}]
  %s7 = inlined_call_operand.vmem [shape: f32[128,128], index: 7, kind: input, shape index: {}]
  %s8 = inlined_call_operand.vmem [shape: f32[1,128], index: 8, kind: input, shape index: {}]
  %s9 = inlined_call_operand.vmem [shape: f32[8,128], index: 9, kind: output, shape index: {}]
  %s10 = sld [smem:[#allocation0]]
  $region46: #{actor_forward.1} parent=0
    _
  %s12 = ssub.s32 1, %s10
  %s13 = scalar_select 0, %s12, %s10
  // Predicated region
  $region2: #{actor_forward.1} parent=0 // pred_check
    _
  $region3: #{actor_forward.1} parent=0 // pred_check_branch
    %15 = sbr.rel (0) target = $region5
  $region4: #{actor_forward.1} parent=0 // pred_region
    _
  $region5: #{actor_forward.1} parent=0 // pred_fallthru
    _
  // Predicated region
  $region6: #{actor_forward.1} parent=0 // pred_check
    _
  $region7: #{actor_forward.1} parent=0 // pred_check_branch
    %17 = sbr.rel (0) target = $region9
  $region8: #{actor_forward.1} parent=0 // pred_region
    _
  $region9: #{actor_forward.1} parent=0 // pred_fallthru
    _
  // Predicated region
  $region10: #{actor_forward.1} parent=0 // pred_check
    _
  $region11: #{actor_forward.1} parent=0 // pred_check_branch
    %19 = sbr.rel (0) target = $region13
  $region12: #{actor_forward.1} parent=0 // pred_region
    _
  $region13: #{actor_forward.1} parent=0 // pred_fallthru
    _
  // Predicated region
  $region14: #{actor_forward.1} parent=0 // pred_check
    _
  $region15: #{actor_forward.1} parent=0 // pred_check_branch
    %21 = sbr.rel (0) target = $region17
  $region16: #{actor_forward.1} parent=0 // pred_region
    _
  $region17: #{actor_forward.1} parent=0 // pred_fallthru
    _
  // Predicated region
  $region18: #{actor_forward.1} parent=0 // pred_check
    _
  $region19: #{actor_forward.1} parent=0 // pred_check_branch
    %23 = sbr.rel (0) target = $region21
  $region20: #{actor_forward.1} parent=0 // pred_region
    _
  $region21: #{actor_forward.1} parent=0 // pred_fallthru
    _
  // Predicated region
  $region22: #{actor_forward.1} parent=0 // pred_check
    _
  $region23: #{actor_forward.1} parent=0 // pred_check_branch
    %25 = sbr.rel (0) target = $region25
  $region24: #{actor_forward.1} parent=0 // pred_region
    _
  $region25: #{actor_forward.1} parent=0 // pred_fallthru
    _
  // Predicated region
  $region26: #{actor_forward.1} parent=0 // pred_check
    _
  $region27: #{actor_forward.1} parent=0 // pred_check_branch
    %27 = sbr.rel (0) target = $region29
  $region28: #{actor_forward.1} parent=0 // pred_region
    _
  $region29: #{actor_forward.1} parent=0 // pred_fallthru
    _
  // Predicated region
  $region30: #{actor_forward.1} parent=0 // pred_check
    _
  $region31: #{actor_forward.1} parent=0 // pred_check_branch
    %29 = sbr.rel (0) target = $region33
  $region32: #{actor_forward.1} parent=0 // pred_region
    _
  $region33: #{actor_forward.1} parent=0 // pred_fallthru
    _
  // Predicated region
  $region34: #{actor_forward.1} parent=0 // pred_check
    _
  $region35: #{actor_forward.1} parent=0 // pred_check_branch
    %31 = sbr.rel (0) target = $region37
  $region36: #{actor_forward.1} parent=0 // pred_region
    _
  $region37: #{actor_forward.1} parent=0 // pred_fallthru
    _
  %v32 = vld [vmem:[%s0] sm:$0xff]
  %v33 = vld [vmem:[%s0 + $0x8] sm:$0xff]
  %v34 = vld [vmem:[%s0 + $0x10] sm:$0xff]
  %v35 = vld [vmem:[%s0 + $0x18] sm:$0xff]
  %v36 = vld [vmem:[%s0 + $0x20] sm:$0xff]
  %v37 = vld [vmem:[%s0 + $0x28] sm:$0xff]
  %v38 = vld [vmem:[%s0 + $0x30] sm:$0xff]
  %v39 = vld [vmem:[%s0 + $0x38] sm:$0xff]
  %v40 = vld [vmem:[%s1] sm:$0xff]
  %v41 = vld [vmem:[%s1 + $0x8] sm:$0xff]
  %v42 = vld [vmem:[%s1 + $0x10] sm:$0xff]
  %v43 = vld [vmem:[%s1 + $0x18] sm:$0xff]
  %v44 = vld [vmem:[%s1 + $0x20] sm:$0xff]
  %v45 = vld [vmem:[%s1 + $0x28] sm:$0xff]
  %v46 = vld [vmem:[%s3] sm:$0x7]
  %v48 = vlaneseq
  %v49 = vshrl.u32 %v48, 7
  %v50 = vsub.s32 0, %v49
  %v51 = vrot.slane %v46, %v50
  %v52 = vlaneseq
  %v53 = vshrl.u32 %v52, 7
  %v54 = vsub.s32 1, %v53
  %v55 = vrot.slane %v46, %v54
  %v56 = vlaneseq
  %v57 = vshrl.u32 %v56, 7
  %v58 = vsub.s32 2, %v57
  %v59 = vrot.slane %v46, %v58
  %vm63 = vcmask 130048
  %v65 = vsel %vm63, %v32, 0
  %v68 = vsel %vm63, %v33, 0
  %v71 = vsel %vm63, %v34, 0
  %v74 = vsel %vm63, %v35, 0
  %v77 = vsel %vm63, %v36, 0
  %v80 = vsel %vm63, %v37, 0
  %v83 = vsel %vm63, %v38, 0
  %v86 = vsel %vm63, %v39, 0
  %88 = vmatprep.subr.mxu0 %v41
  %89 = vmatpush1.msra.mxu0 %v40
  %90 = vmatprep.subr.mxu0 %v44
  %91 = vmatpush1.msra.mxu0 %v43
  %92 = vmatprep.subr.mxu0 0.0
  %93 = vmatpush1.msra.mxu0 0.0
  %94 = vmatprep.subr.mxu0 0.0
  %95 = vmatpush1.msra.mxu0 0.0
  %96 = vmatprep.subr.mxu0 0.0
  %97 = vmatpush1.msra.mxu0 0.0
  %98 = vmatprep.subr.mxu0 0.0
  %99 = vmatpush1.msra.mxu0 0.0
  %100 = vmatprep.subr.mxu0 0.0
  %101 = vmatpush1.msra.mxu0 0.0
  %102 = vmatprep.subr.mxu0 0.0
  %103 = vmatpush1.msra.mxu0 0.0
  %104 = vmatprep.subr.mxu0 0.0
  %105 = vmatpush1.msra.mxu0 0.0
  %106 = vmatprep.subr.mxu0 0.0
  %107 = vmatpush1.msra.mxu0 0.0
  %108 = vmatprep.subr.mxu0 0.0
  %109 = vmatpush1.msra.mxu0 0.0
  %110 = vmatprep.subr.mxu0 0.0
  %111 = vmatpush1.msra.mxu0 0.0
  %112 = vmatprep.subr.mxu0 0.0
  %113 = vmatpush1.msra.mxu0 0.0
  %114 = vmatprep.subr.mxu0 0.0
  %115 = vmatpush1.msra.mxu0 0.0
  %116 = vmatprep.subr.mxu0 0.0
  %117 = vmatpush1.msra.mxu0 0.0
  %118 = vmatprep.subr.mxu0 0.0
  %119 = vmatpush1.msra.mxu0 0.0
  %120 = vmatprep.subr.mxu0 0.0
  %121 = vmatpush1.msra.mxu0 0.0
  %122 = vmatprep.subr.mxu0 0.0
  %123 = vmatpush1.msra.mxu0 0.0
  %124 = vmatprep.subr.mxu0 0.0
  %125 = vmatpush1.msra.mxu0 0.0
  %126 = vmatprep.subr.mxu0 0.0
  %127 = vmatpush1.msra.mxu0 0.0
  %128 = vmatprep.subr.mxu0 0.0
  %129 = vmatpush1.msra.mxu0 0.0
  %130 = vmatprep.subr.mxu0 0.0
  %131 = vmatpush1.msra.mxu0 0.0
  %132 = vmatprep.subr.mxu0 0.0
  %133 = vmatpush1.msra.mxu0 0.0
  %134 = vmatprep.subr.mxu0 0.0
  %135 = vmatpush1.msra.mxu0 0.0
  %136 = vmatprep.subr.mxu0 0.0
  %137 = vmatpush1.msra.mxu0 0.0
  %138 = vmatprep.subr.mxu0 0.0
  %139 = vmatpush1.msra.mxu0 0.0
  %140 = vmatprep.subr.mxu0 0.0
  %141 = vmatpush1.msra.mxu0 0.0
  %142 = vmatprep.subr.mxu0 0.0
  %143 = vmatpush1.msra.mxu0 0.0
  %144 = vmatprep.subr.mxu0 0.0
  %145 = vmatpush1.msra.mxu0 0.0
  %146 = vmatprep.subr.mxu0 0.0
  %147 = vmatpush1.msra.mxu0 0.0
  %148 = vmatprep.subr.mxu0 0.0
  %149 = vmatpush1.msra.mxu0 0.0
  %150 = vmatprep.subr.mxu0 0.0
  %151 = vmatpush1.msra.mxu0 0.0
  %152 = vmatprep.mubr.f32.mxu0 0.0
  %153 = vmatmul.mubr.f32.gmra.mrb[0].mxu0 %v65
  %v154 = vpop.f32.mrb[0].mxu0
  %v155 = vadd.f32 %v51, %v154
  %v156 = vpop.f32.mrb[0].mxu0
  %v157 = vadd.f32 %v55, %v156
  %158 = vmatprep.mubr.f32.mxu0 0.0
  %159 = vmatmul.mubr.f32.gmra.mrb[0].mxu0 %v68
  %v160 = vpop.f32.mrb[0].mxu0
  %v161 = vadd.f32 %v51, %v160
  %v162 = vpop.f32.mrb[0].mxu0
  %v163 = vadd.f32 %v55, %v162
  %164 = vmatprep.mubr.f32.mxu0 0.0
  %165 = vmatmul.mubr.f32.gmra.mrb[0].mxu0 %v71
  %v166 = vpop.f32.mrb[0].mxu0
  %v167 = vadd.f32 %v51, %v166
  %v168 = vpop.f32.mrb[0].mxu0
  %v169 = vadd.f32 %v55, %v168
  %170 = vmatprep.mubr.f32.mxu0 0.0
  %171 = vmatmul.mubr.f32.gmra.mrb[0].mxu0 %v74
  %v172 = vpop.f32.mrb[0].mxu0
  %v173 = vadd.f32 %v51, %v172
  %v174 = vpop.f32.mrb[0].mxu0
  %v175 = vadd.f32 %v55, %v174
  %176 = vmatprep.mubr.f32.mxu0 0.0
  %177 = vmatmul.mubr.f32.gmra.mrb[0].mxu0 %v77
  %v178 = vpop.f32.mrb[0].mxu0
  %v179 = vadd.f32 %v51, %v178
  %v180 = vpop.f32.mrb[0].mxu0
  %v181 = vadd.f32 %v55, %v180
  %182 = vmatprep.mubr.f32.mxu0 0.0
  %183 = vmatmul.mubr.f32.gmra.mrb[0].mxu0 %v80
  %v184 = vpop.f32.mrb[0].mxu0
  %v185 = vadd.f32 %v51, %v184
  %v186 = vpop.f32.mrb[0].mxu0
  %v187 = vadd.f32 %v55, %v186
  %188 = vmatprep.mubr.f32.mxu0 0.0
  %189 = vmatmul.mubr.f32.gmra.mrb[0].mxu0 %v83
  %v190 = vpop.f32.mrb[0].mxu0
  %v191 = vadd.f32 %v51, %v190
  %v192 = vpop.f32.mrb[0].mxu0
  %v193 = vadd.f32 %v55, %v192
  %194 = vmatprep.mubr.f32.mxu0 0.0
  %195 = vmatmul.mubr.f32.gmra.mrb[0].mxu0 %v86
  %v196 = vpop.f32.mrb[0].mxu0
  %v197 = vadd.f32 %v51, %v196
  %v198 = vpop.f32.mrb[0].mxu0
  %v199 = vadd.f32 %v55, %v198
  %200 = vdwg.mxu0
  %201 = vmatprep.subr.mxu0 0.0
  %202 = vmatpush1.msra.mxu0 %v42
  %203 = vmatprep.subr.mxu0 0.0
  %204 = vmatpush1.msra.mxu0 %v45
  %205 = vmatprep.subr.mxu0 0.0
  %206 = vmatpush1.msra.mxu0 0.0
  %207 = vmatprep.subr.mxu0 0.0
  %208 = vmatpush1.msra.mxu0 0.0
  %209 = vmatprep.subr.mxu0 0.0
  %210 = vmatpush1.msra.mxu0 0.0
  %211 = vmatprep.subr.mxu0 0.0
  %212 = vmatpush1.msra.mxu0 0.0
  %213 = vmatprep.subr.mxu0 0.0
  %214 = vmatpush1.msra.mxu0 0.0
  %215 = vmatprep.subr.mxu0 0.0
  %216 = vmatpush1.msra.mxu0 0.0
  %217 = vmatprep.subr.mxu0 0.0
  %218 = vmatpush1.msra.mxu0 0.0
  %219 = vmatprep.subr.mxu0 0.0
  %220 = vmatpush1.msra.mxu0 0.0
  %221 = vmatprep.subr.mxu0 0.0
  %222 = vmatpush1.msra.mxu0 0.0
  %223 = vmatprep.subr.mxu0 0.0
  %224 = vmatpush1.msra.mxu0 0.0
  %225 = vmatprep.subr.mxu0 0.0
  %226 = vmatpush1.msra.mxu0 0.0
  %227 = vmatprep.subr.mxu0 0.0
  %228 = vmatpush1.msra.mxu0 0.0
  %229 = vmatprep.subr.mxu0 0.0
  %230 = vmatpush1.msra.mxu0 0.0
  %231 = vmatprep.subr.mxu0 0.0
  %232 = vmatpush1.msra.mxu0 0.0
  %233 = vmatprep.subr.mxu0 0.0
  %234 = vmatpush1.msra.mxu0 0.0
  %235 = vmatprep.subr.mxu0 0.0
  %236 = vmatpush1.msra.mxu0 0.0
  %237 = vmatprep.subr.mxu0 0.0
  %238 = vmatpush1.msra.mxu0 0.0
  %239 = vmatprep.subr.mxu0 0.0
  %240 = vmatpush1.msra.mxu0 0.0
  %241 = vmatprep.subr.mxu0 0.0
  %242 = vmatpush1.msra.mxu0 0.0
  %243 = vmatprep.subr.mxu0 0.0
  %244 = vmatpush1.msra.mxu0 0.0
  %245 = vmatprep.subr.mxu0 0.0
  %246 = vmatpush1.msra.mxu0 0.0
  %247 = vmatprep.subr.mxu0 0.0
  %248 = vmatpush1.msra.mxu0 0.0
  %249 = vmatprep.subr.mxu0 0.0
  %250 = vmatpush1.msra.mxu0 0.0
  %251 = vmatprep.subr.mxu0 0.0
  %252 = vmatpush1.msra.mxu0 0.0
  %253 = vmatprep.subr.mxu0 0.0
  %254 = vmatpush1.msra.mxu0 0.0
  %255 = vmatprep.subr.mxu0 0.0
  %256 = vmatpush1.msra.mxu0 0.0
  %257 = vmatprep.subr.mxu0 0.0
  %258 = vmatpush1.msra.mxu0 0.0
  %259 = vmatprep.subr.mxu0 0.0
  %260 = vmatpush1.msra.mxu0 0.0
  %261 = vmatprep.subr.mxu0 0.0
  %262 = vmatpush1.msra.mxu0 0.0
  %263 = vmatprep.subr.mxu0 0.0
  %264 = vmatpush1.msra.mxu0 0.0
  %265 = vmatprep.mubr.f32.mxu0 0.0
  %266 = vmatmul.mubr.f32.gmra.mrb[0].mxu0 %v65
  %v267 = vpop.f32.mrb[0].mxu0
  %v268 = vadd.f32 %v59, %v267
  %v269 = vpop.f32.mrb[0].mxu0
  %270 = vmatprep.mubr.f32.mxu0 0.0
  %271 = vmatmul.mubr.f32.gmra.mrb[0].mxu0 %v68
  %v272 = vpop.f32.mrb[0].mxu0
  %v273 = vadd.f32 %v59, %v272
  %v274 = vpop.f32.mrb[0].mxu0
  %275 = vmatprep.mubr.f32.mxu0 0.0
  %276 = vmatmul.mubr.f32.gmra.mrb[0].mxu0 %v71
  %v277 = vpop.f32.mrb[0].mxu0
  %v278 = vadd.f32 %v59, %v277
  %v279 = vpop.f32.mrb[0].mxu0
  %280 = vmatprep.mubr.f32.mxu0 0.0
  %281 = vmatmul.mubr.f32.gmra.mrb[0].mxu0 %v74
  %v282 = vpop.f32.mrb[0].mxu0
  %v283 = vadd.f32 %v59, %v282
  %v284 = vpop.f32.mrb[0].mxu0
  %285 = vmatprep.mubr.f32.mxu0 0.0
  %286 = vmatmul.mubr.f32.gmra.mrb[0].mxu0 %v77
  %v287 = vpop.f32.mrb[0].mxu0
  %v288 = vadd.f32 %v59, %v287
  %v289 = vpop.f32.mrb[0].mxu0
  %290 = vmatprep.mubr.f32.mxu0 0.0
  %291 = vmatmul.mubr.f32.gmra.mrb[0].mxu0 %v80
  %v292 = vpop.f32.mrb[0].mxu0
  %v293 = vadd.f32 %v59, %v292
  %v294 = vpop.f32.mrb[0].mxu0
  %295 = vmatprep.mubr.f32.mxu0 0.0
  %296 = vmatmul.mubr.f32.gmra.mrb[0].mxu0 %v83
  %v297 = vpop.f32.mrb[0].mxu0
  %v298 = vadd.f32 %v59, %v297
  %v299 = vpop.f32.mrb[0].mxu0
  %300 = vmatprep.mubr.f32.mxu0 0.0
  %301 = vmatmul.mubr.f32.gmra.mrb[0].mxu0 %v86
  %v302 = vpop.f32.mrb[0].mxu0
  %v303 = vadd.f32 %v59, %v302
  %v304 = vpop.f32.mrb[0].mxu0
  %305 = vdwg.mxu0
  %v306 = vld [vmem:[%s2] sm:$0xff]
  %v307 = vld [vmem:[%s2 + $0x8] sm:$0xff]
  %v308 = vld [vmem:[%s2 + $0x10] sm:$0xff]
  %v309 = vld [vmem:[%s2 + $0x18] sm:$0xff]
  %v310 = vld [vmem:[%s2 + $0x20] sm:$0xff]
  %v311 = vld [vmem:[%s2 + $0x28] sm:$0xff]
  %v312 = vld [vmem:[%s2 + $0x30] sm:$0xff]
  %v313 = vld [vmem:[%s2 + $0x38] sm:$0xff]
  %v314 = vld [vmem:[%s2 + $0x40] sm:$0xff]
  %v315 = vld [vmem:[%s2 + $0x48] sm:$0xff]
  %v316 = vld [vmem:[%s2 + $0x50] sm:$0xff]
  %v317 = vld [vmem:[%s2 + $0x58] sm:$0xff]
  %v318 = vld [vmem:[%s2 + $0x60] sm:$0xff]
  %v319 = vld [vmem:[%s2 + $0x68] sm:$0xff]
  %v320 = vld [vmem:[%s2 + $0x70] sm:$0xff]
  %v321 = vld [vmem:[%s2 + $0x78] sm:$0xff]
  %v322 = vld [vmem:[%s2 + $0x80] sm:$0xff]
  %v323 = vld [vmem:[%s2 + $0x88] sm:$0xff]
  %v324 = vld [vmem:[%s2 + $0x90] sm:$0xff]
  %v325 = vld [vmem:[%s2 + $0x98] sm:$0xff]
  %v326 = vld [vmem:[%s2 + $0xa0] sm:$0xff]
  %v327 = vld [vmem:[%s2 + $0xa8] sm:$0xff]
  %v328 = vld [vmem:[%s2 + $0xb0] sm:$0xff]
  %v329 = vld [vmem:[%s2 + $0xb8] sm:$0xff]
  %v330 = vld [vmem:[%s2 + $0xc0] sm:$0xff]
  %v331 = vld [vmem:[%s2 + $0xc8] sm:$0xff]
  %v332 = vld [vmem:[%s2 + $0xd0] sm:$0xff]
  %v333 = vld [vmem:[%s2 + $0xd8] sm:$0xff]
  %v334 = vld [vmem:[%s2 + $0xe0] sm:$0xff]
  %v335 = vld [vmem:[%s2 + $0xe8] sm:$0xff]
  %v336 = vld [vmem:[%s2 + $0xf0] sm:$0xff]
  %v337 = vld [vmem:[%s2 + $0xf8] sm:$0xff]
  %v338 = vld [vmem:[%s2 + $0x100] sm:$0xff]
  %v339 = vld [vmem:[%s2 + $0x108] sm:$0xff]
  %v340 = vld [vmem:[%s2 + $0x110] sm:$0xff]
  %v341 = vld [vmem:[%s2 + $0x118] sm:$0xff]
  %v342 = vld [vmem:[%s2 + $0x120] sm:$0xff]
  %v343 = vld [vmem:[%s2 + $0x128] sm:$0xff]
  %v344 = vld [vmem:[%s2 + $0x130] sm:$0xff]
  %v345 = vld [vmem:[%s2 + $0x138] sm:$0xff]
  %v346 = vld [vmem:[%s2 + $0x140] sm:$0xff]
  %v347 = vld [vmem:[%s2 + $0x148] sm:$0xff]
  %v348 = vld [vmem:[%s2 + $0x150] sm:$0xff]
  %v349 = vld [vmem:[%s2 + $0x158] sm:$0xff]
  %v350 = vld [vmem:[%s2 + $0x160] sm:$0xff]
  %v351 = vld [vmem:[%s2 + $0x168] sm:$0xff]
  %v352 = vld [vmem:[%s2 + $0x170] sm:$0xff]
  %v353 = vld [vmem:[%s2 + $0x178] sm:$0xff]
  %v354 = vld [vmem:[%s4] sm:$0x1]
  %v356 = vlaneseq
  %v357 = vshrl.u32 %v356, 7
  %v358 = vsub.s32 0, %v357
  %v359 = vrot.slane %v354, %v358
  %361 = vmatprep.subr.mxu0 %v307
  %362 = vmatpush1.msra.mxu0 %v306
  %363 = vmatprep.subr.mxu0 %v310
  %364 = vmatpush1.msra.mxu0 %v309
  %365 = vmatprep.subr.mxu0 %v313
  %366 = vmatpush1.msra.mxu0 %v312
  %367 = vmatprep.subr.mxu0 %v316
  %368 = vmatpush1.msra.mxu0 %v315
  %369 = vmatprep.subr.mxu0 %v319
  %370 = vmatpush1.msra.mxu0 %v318
  %371 = vmatprep.subr.mxu0 %v322
  %372 = vmatpush1.msra.mxu0 %v321
  %373 = vmatprep.subr.mxu0 %v325
  %374 = vmatpush1.msra.mxu0 %v324
  %375 = vmatprep.subr.mxu0 %v328
  %376 = vmatpush1.msra.mxu0 %v327
  %377 = vmatprep.subr.mxu0 %v331
  %378 = vmatpush1.msra.mxu0 %v330
  %379 = vmatprep.subr.mxu0 %v334
  %380 = vmatpush1.msra.mxu0 %v333
  %381 = vmatprep.subr.mxu0 %v337
  %382 = vmatpush1.msra.mxu0 %v336
  %383 = vmatprep.subr.mxu0 %v340
  %384 = vmatpush1.msra.mxu0 %v339
  %385 = vmatprep.subr.mxu0 %v343
  %386 = vmatpush1.msra.mxu0 %v342
  %387 = vmatprep.subr.mxu0 %v346
  %388 = vmatpush1.msra.mxu0 %v345
  %389 = vmatprep.subr.mxu0 %v349
  %390 = vmatpush1.msra.mxu0 %v348
  %391 = vmatprep.subr.mxu0 %v352
  %392 = vmatpush1.msra.mxu0 %v351
  %393 = vmatprep.subr.mxu0 0.0
  %394 = vmatpush1.msra.mxu0 0.0
  %395 = vmatprep.subr.mxu0 0.0
  %396 = vmatpush1.msra.mxu0 0.0
  %397 = vmatprep.subr.mxu0 0.0
  %398 = vmatpush1.msra.mxu0 0.0
  %399 = vmatprep.subr.mxu0 0.0
  %400 = vmatpush1.msra.mxu0 0.0
  %401 = vmatprep.subr.mxu0 0.0
  %402 = vmatpush1.msra.mxu0 0.0
  %403 = vmatprep.subr.mxu0 0.0
  %404 = vmatpush1.msra.mxu0 0.0
  %405 = vmatprep.subr.mxu0 0.0
  %406 = vmatpush1.msra.mxu0 0.0
  %407 = vmatprep.subr.mxu0 0.0
  %408 = vmatpush1.msra.mxu0 0.0
  %409 = vmatprep.subr.mxu0 0.0
  %410 = vmatpush1.msra.mxu0 0.0
  %411 = vmatprep.subr.mxu0 0.0
  %412 = vmatpush1.msra.mxu0 0.0
  %413 = vmatprep.subr.mxu0 0.0
  %414 = vmatpush1.msra.mxu0 0.0
  %415 = vmatprep.subr.mxu0 0.0
  %416 = vmatpush1.msra.mxu0 0.0
  %417 = vmatprep.subr.mxu0 0.0
  %418 = vmatpush1.msra.mxu0 0.0
  %419 = vmatprep.subr.mxu0 0.0
  %420 = vmatpush1.msra.mxu0 0.0
  %421 = vmatprep.subr.mxu0 0.0
  %422 = vmatpush1.msra.mxu0 0.0
  %423 = vmatprep.subr.mxu0 0.0
  %424 = vmatpush1.msra.mxu0 0.0
  %425 = vmatprep.mubr.f32.mxu0 0.0
  %426 = vmatmul.mubr.f32.gmra.mrb[0].mxu0 0.0
  %v427 = vpop.f32.mrb[0].mxu0
  %v428 = vadd.f32 0.0, %v427
  %v429 = vpop.f32.mrb[0].mxu0
  %v430 = vadd.f32 0.0, %v429
  %431 = vdwg.mxu0
  %432 = vmatprep.subr.mxu0 0.0
  %433 = vmatpush1.msra.mxu0 %v308
  %434 = vmatprep.subr.mxu0 0.0
  %435 = vmatpush1.msra.mxu0 %v311
  %436 = vmatprep.subr.mxu0 0.0
  %437 = vmatpush1.msra.mxu0 %v314
  %438 = vmatprep.subr.mxu0 0.0
  %439 = vmatpush1.msra.mxu0 %v317
  %440 = vmatprep.subr.mxu0 0.0
  %441 = vmatpush1.msra.mxu0 %v320
  %442 = vmatprep.subr.mxu0 0.0
  %443 = vmatpush1.msra.mxu0 %v323
  %444 = vmatprep.subr.mxu0 0.0
  %445 = vmatpush1.msra.mxu0 %v326
  %446 = vmatprep.subr.mxu0 0.0
  %447 = vmatpush1.msra.mxu0 %v329
  %448 = vmatprep.subr.mxu0 0.0
  %449 = vmatpush1.msra.mxu0 %v332
  %450 = vmatprep.subr.mxu0 0.0
  %451 = vmatpush1.msra.mxu0 %v335
  %452 = vmatprep.subr.mxu0 0.0
  %453 = vmatpush1.msra.mxu0 %v338
  %454 = vmatprep.subr.mxu0 0.0
  %455 = vmatpush1.msra.mxu0 %v341
  %456 = vmatprep.subr.mxu0 0.0
  %457 = vmatpush1.msra.mxu0 %v344
  %458 = vmatprep.subr.mxu0 0.0
  %459 = vmatpush1.msra.mxu0 %v347
  %460 = vmatprep.subr.mxu0 0.0
  %461 = vmatpush1.msra.mxu0 %v350
  %462 = vmatprep.subr.mxu0 0.0
  %463 = vmatpush1.msra.mxu0 %v353
  %464 = vmatprep.subr.mxu0 0.0
  %465 = vmatpush1.msra.mxu0 0.0
  %466 = vmatprep.subr.mxu0 0.0
  %467 = vmatpush1.msra.mxu0 0.0
  %468 = vmatprep.subr.mxu0 0.0
  %469 = vmatpush1.msra.mxu0 0.0
  %470 = vmatprep.subr.mxu0 0.0
  %471 = vmatpush1.msra.mxu0 0.0
  %472 = vmatprep.subr.mxu0 0.0
  %473 = vmatpush1.msra.mxu0 0.0
  %474 = vmatprep.subr.mxu0 0.0
  %475 = vmatpush1.msra.mxu0 0.0
  %476 = vmatprep.subr.mxu0 0.0
  %477 = vmatpush1.msra.mxu0 0.0
  %478 = vmatprep.subr.mxu0 0.0
  %479 = vmatpush1.msra.mxu0 0.0
  %480 = vmatprep.subr.mxu0 0.0
  %481 = vmatpush1.msra.mxu0 0.0
  %482 = vmatprep.subr.mxu0 0.0
  %483 = vmatpush1.msra.mxu0 0.0
  %484 = vmatprep.subr.mxu0 0.0
  %485 = vmatpush1.msra.mxu0 0.0
  %486 = vmatprep.subr.mxu0 0.0
  %487 = vmatpush1.msra.mxu0 0.0
  %488 = vmatprep.subr.mxu0 0.0
  %489 = vmatpush1.msra.mxu0 0.0
  %490 = vmatprep.subr.mxu0 0.0
  %491 = vmatpush1.msra.mxu0 0.0
  %492 = vmatprep.subr.mxu0 0.0
  %493 = vmatpush1.msra.mxu0 0.0
  %494 = vmatprep.subr.mxu0 0.0
  %495 = vmatpush1.msra.mxu0 0.0
  %496 = vmatprep.mubr.f32.mxu0 0.0
  %497 = vmatmul.mubr.f32.gmra.mrb[0].mxu0 0.0
  %v498 = vpop.f32.mrb[0].mxu0
  %v499 = vadd.f32 0.0, %v498
  %v500 = vpop.f32.mrb[0].mxu0
  %501 = vdwg.mxu0
  %v502 = vadd.f32 %v155, %v428
  %v503 = vadd.f32 %v157, %v430
  %v504 = vxor.u32 %v502, 2147483648
  %v505 = vxor.u32 %v503, 2147483648
  %v506 = vmul.f32 %v504, 1.442695
  %v507 = vpow.pop %v506
  %v508 = vmul.f32 %v505, 1.442695
  %v509 = vpow.pop %v508
  %v510 = vadd.f32 %v507, 1.0
  %v511 = vadd.f32 %v509, 1.0
  %v512 = vrcp.pop %v510
  %v513 = vmul.f32 1.0, %v512
  %v514 = vrcp.pop %v511
  %v515 = vmul.f32 1.0, %v514
  %v516 = vadd.f32 %v499, %v359
  %v517 = vmul.f32 %v513, %v516
  %v518 = vadd.f32 %v268, %v517
  %v519 = vtanh.pop %v518
  %v520 = vsub.f32 1.0, %v515
  %v521 = vmul.f32 %v520, %v519
  %v522 = vmul.f32 %v515, 0.0
  %v523 = vadd.f32 %v521, %v522
  %524 = vmatprep.subr.mxu0 %v307
  %525 = vmatpush1.msra.mxu0 %v306
  %526 = vmatprep.subr.mxu0 %v310
  %527 = vmatpush1.msra.mxu0 %v309
  %528 = vmatprep.subr.mxu0 %v313
  %529 = vmatpush1.msra.mxu0 %v312
  %530 = vmatprep.subr.mxu0 %v316
  %531 = vmatpush1.msra.mxu0 %v315
  %532 = vmatprep.subr.mxu0 %v319
  %533 = vmatpush1.msra.mxu0 %v318
  %534 = vmatprep.subr.mxu0 %v322
  %535 = vmatpush1.msra.mxu0 %v321
  %536 = vmatprep.subr.mxu0 %v325
  %537 = vmatpush1.msra.mxu0 %v324
  %538 = vmatprep.subr.mxu0 %v328
  %539 = vmatpush1.msra.mxu0 %v327
  %540 = vmatprep.subr.mxu0 %v331
  %541 = vmatpush1.msra.mxu0 %v330
  %542 = vmatprep.subr.mxu0 %v334
  %543 = vmatpush1.msra.mxu0 %v333
  %544 = vmatprep.subr.mxu0 %v337
  %545 = vmatpush1.msra.mxu0 %v336
  %546 = vmatprep.subr.mxu0 %v340
  %547 = vmatpush1.msra.mxu0 %v339
  %548 = vmatprep.subr.mxu0 %v343
  %549 = vmatpush1.msra.mxu0 %v342
  %550 = vmatprep.subr.mxu0 %v346
  %551 = vmatpush1.msra.mxu0 %v345
  %552 = vmatprep.subr.mxu0 %v349
  %553 = vmatpush1.msra.mxu0 %v348
  %554 = vmatprep.subr.mxu0 %v352
  %555 = vmatpush1.msra.mxu0 %v351
  %556 = vmatprep.subr.mxu0 0.0
  %557 = vmatpush1.msra.mxu0 0.0
  %558 = vmatprep.subr.mxu0 0.0
  %559 = vmatpush1.msra.mxu0 0.0
  %560 = vmatprep.subr.mxu0 0.0
  %561 = vmatpush1.msra.mxu0 0.0
  %562 = vmatprep.subr.mxu0 0.0
  %563 = vmatpush1.msra.mxu0 0.0
  %564 = vmatprep.subr.mxu0 0.0
  %565 = vmatpush1.msra.mxu0 0.0
  %566 = vmatprep.subr.mxu0 0.0
  %567 = vmatpush1.msra.mxu0 0.0
  %568 = vmatprep.subr.mxu0 0.0
  %569 = vmatpush1.msra.mxu0 0.0
  %570 = vmatprep.subr.mxu0 0.0
  %571 = vmatpush1.msra.mxu0 0.0
  %572 = vmatprep.subr.mxu0 0.0
  %573 = vmatpush1.msra.mxu0 0.0
  %574 = vmatprep.subr.mxu0 0.0
  %575 = vmatpush1.msra.mxu0 0.0
  %576 = vmatprep.subr.mxu0 0.0
  %577 = vmatpush1.msra.mxu0 0.0
  %578 = vmatprep.subr.mxu0 0.0
  %579 = vmatpush1.msra.mxu0 0.0
  %580 = vmatprep.subr.mxu0 0.0
  %581 = vmatpush1.msra.mxu0 0.0
  %582 = vmatprep.subr.mxu0 0.0
  %583 = vmatpush1.msra.mxu0 0.0
  %584 = vmatprep.subr.mxu0 0.0
  %585 = vmatpush1.msra.mxu0 0.0
  %586 = vmatprep.subr.mxu0 0.0
  %587 = vmatpush1.msra.mxu0 0.0
  %588 = vmatprep.mubr.f32.mxu0 0.0
  %589 = vmatmul.mubr.f32.gmra.mrb[0].mxu0 %v523
  %v590 = vpop.f32.mrb[0].mxu0
  %v591 = vadd.f32 0.0, %v590
  %v592 = vpop.f32.mrb[0].mxu0
  %v593 = vadd.f32 0.0, %v592
  %594 = vdwg.mxu0
  %595 = vmatprep.subr.mxu0 0.0
  %596 = vmatpush1.msra.mxu0 %v308
  %597 = vmatprep.subr.mxu0 0.0
  %598 = vmatpush1.msra.mxu0 %v311
  %599 = vmatprep.subr.mxu0 0.0
  %600 = vmatpush1.msra.mxu0 %v314
  %601 = vmatprep.subr.mxu0 0.0
  %602 = vmatpush1.msra.mxu0 %v317
  %603 = vmatprep.subr.mxu0 0.0
  %604 = vmatpush1.msra.mxu0 %v320
  %605 = vmatprep.subr.mxu0 0.0
  %606 = vmatpush1.msra.mxu0 %v323
  %607 = vmatprep.subr.mxu0 0.0
  %608 = vmatpush1.msra.mxu0 %v326
  %609 = vmatprep.subr.mxu0 0.0
  %610 = vmatpush1.msra.mxu0 %v329
  %611 = vmatprep.subr.mxu0 0.0
  %612 = vmatpush1.msra.mxu0 %v332
  %613 = vmatprep.subr.mxu0 0.0
  %614 = vmatpush1.msra.mxu0 %v335
  %615 = vmatprep.subr.mxu0 0.0
  %616 = vmatpush1.msra.mxu0 %v338
  %617 = vmatprep.subr.mxu0 0.0
  %618 = vmatpush1.msra.mxu0 %v341
  %619 = vmatprep.subr.mxu0 0.0
  %620 = vmatpush1.msra.mxu0 %v344
  %621 = vmatprep.subr.mxu0 0.0
  %622 = vmatpush1.msra.mxu0 %v347
  %623 = vmatprep.subr.mxu0 0.0
  %624 = vmatpush1.msra.mxu0 %v350
  %625 = vmatprep.subr.mxu0 0.0
  %626 = vmatpush1.msra.mxu0 %v353
  %627 = vmatprep.subr.mxu0 0.0
  %628 = vmatpush1.msra.mxu0 0.0
  %629 = vmatprep.subr.mxu0 0.0
  %630 = vmatpush1.msra.mxu0 0.0
  %631 = vmatprep.subr.mxu0 0.0
  %632 = vmatpush1.msra.mxu0 0.0
  %633 = vmatprep.subr.mxu0 0.0
  %634 = vmatpush1.msra.mxu0 0.0
  %635 = vmatprep.subr.mxu0 0.0
  %636 = vmatpush1.msra.mxu0 0.0
  %637 = vmatprep.subr.mxu0 0.0
  %638 = vmatpush1.msra.mxu0 0.0
  %639 = vmatprep.subr.mxu0 0.0
  %640 = vmatpush1.msra.mxu0 0.0
  %641 = vmatprep.subr.mxu0 0.0
  %642 = vmatpush1.msra.mxu0 0.0
  %643 = vmatprep.subr.mxu0 0.0
  %644 = vmatpush1.msra.mxu0 0.0
  %645 = vmatprep.subr.mxu0 0.0
  %646 = vmatpush1.msra.mxu0 0.0
  %647 = vmatprep.subr.mxu0 0.0
  %648 = vmatpush1.msra.mxu0 0.0
  %649 = vmatprep.subr.mxu0 0.0
  %650 = vmatpush1.msra.mxu0 0.0
  %651 = vmatprep.subr.mxu0 0.0
  %652 = vmatpush1.msra.mxu0 0.0
  %653 = vmatprep.subr.mxu0 0.0
  %654 = vmatpush1.msra.mxu0 0.0
  %655 = vmatprep.subr.mxu0 0.0
  %656 = vmatpush1.msra.mxu0 0.0
  %657 = vmatprep.subr.mxu0 0.0
  %658 = vmatpush1.msra.mxu0 0.0
  %659 = vmatprep.mubr.f32.mxu0 0.0
  %660 = vmatmul.mubr.f32.gmra.mrb[0].mxu0 %v523
  %v661 = vpop.f32.mrb[0].mxu0
  %v662 = vadd.f32 0.0, %v661
  %v663 = vpop.f32.mrb[0].mxu0
  %664 = vdwg.mxu0
  %v665 = vadd.f32 %v161, %v591
  %v666 = vadd.f32 %v163, %v593
  %v667 = vxor.u32 %v665, 2147483648
  %v668 = vxor.u32 %v666, 2147483648
  %v669 = vmul.f32 %v667, 1.442695
  %v670 = vpow.pop %v669
  %v671 = vmul.f32 %v668, 1.442695
  %v672 = vpow.pop %v671
  %v673 = vadd.f32 %v670, 1.0
  %v674 = vadd.f32 %v672, 1.0
  %v675 = vrcp.pop %v673
  %v676 = vmul.f32 1.0, %v675
  %v677 = vrcp.pop %v674
  %v678 = vmul.f32 1.0, %v677
  %v679 = vadd.f32 %v662, %v359
  %v680 = vmul.f32 %v676, %v679
  %v681 = vadd.f32 %v273, %v680
  %v682 = vtanh.pop %v681
  %v683 = vsub.f32 1.0, %v678
  %v684 = vmul.f32 %v683, %v682
  %v685 = vmul.f32 %v678, %v523
  %v686 = vadd.f32 %v684, %v685
  %687 = vmatprep.subr.mxu0 %v307
  %688 = vmatpush1.msra.mxu0 %v306
  %689 = vmatprep.subr.mxu0 %v310
  %690 = vmatpush1.msra.mxu0 %v309
  %691 = vmatprep.subr.mxu0 %v313
  %692 = vmatpush1.msra.mxu0 %v312
  %693 = vmatprep.subr.mxu0 %v316
  %694 = vmatpush1.msra.mxu0 %v315
  %695 = vmatprep.subr.mxu0 %v319
  %696 = vmatpush1.msra.mxu0 %v318
  %697 = vmatprep.subr.mxu0 %v322
  %698 = vmatpush1.msra.mxu0 %v321
  %699 = vmatprep.subr.mxu0 %v325
  %700 = vmatpush1.msra.mxu0 %v324
  %701 = vmatprep.subr.mxu0 %v328
  %702 = vmatpush1.msra.mxu0 %v327
  %703 = vmatprep.subr.mxu0 %v331
  %704 = vmatpush1.msra.mxu0 %v330
  %705 = vmatprep.subr.mxu0 %v334
  %706 = vmatpush1.msra.mxu0 %v333
  %707 = vmatprep.subr.mxu0 %v337
  %708 = vmatpush1.msra.mxu0 %v336
  %709 = vmatprep.subr.mxu0 %v340
  %710 = vmatpush1.msra.mxu0 %v339
  %711 = vmatprep.subr.mxu0 %v343
  %712 = vmatpush1.msra.mxu0 %v342
  %713 = vmatprep.subr.mxu0 %v346
  %714 = vmatpush1.msra.mxu0 %v345
  %715 = vmatprep.subr.mxu0 %v349
  %716 = vmatpush1.msra.mxu0 %v348
  %717 = vmatprep.subr.mxu0 %v352
  %718 = vmatpush1.msra.mxu0 %v351
  %719 = vmatprep.subr.mxu0 0.0
  %720 = vmatpush1.msra.mxu0 0.0
  %721 = vmatprep.subr.mxu0 0.0
  %722 = vmatpush1.msra.mxu0 0.0
  %723 = vmatprep.subr.mxu0 0.0
  %724 = vmatpush1.msra.mxu0 0.0
  %725 = vmatprep.subr.mxu0 0.0
  %726 = vmatpush1.msra.mxu0 0.0
  %727 = vmatprep.subr.mxu0 0.0
  %728 = vmatpush1.msra.mxu0 0.0
  %729 = vmatprep.subr.mxu0 0.0
  %730 = vmatpush1.msra.mxu0 0.0
  %731 = vmatprep.subr.mxu0 0.0
  %732 = vmatpush1.msra.mxu0 0.0
  %733 = vmatprep.subr.mxu0 0.0
  %734 = vmatpush1.msra.mxu0 0.0
  %735 = vmatprep.subr.mxu0 0.0
  %736 = vmatpush1.msra.mxu0 0.0
  %737 = vmatprep.subr.mxu0 0.0
  %738 = vmatpush1.msra.mxu0 0.0
  %739 = vmatprep.subr.mxu0 0.0
  %740 = vmatpush1.msra.mxu0 0.0
  %741 = vmatprep.subr.mxu0 0.0
  %742 = vmatpush1.msra.mxu0 0.0
  %743 = vmatprep.subr.mxu0 0.0
  %744 = vmatpush1.msra.mxu0 0.0
  %745 = vmatprep.subr.mxu0 0.0
  %746 = vmatpush1.msra.mxu0 0.0
  %747 = vmatprep.subr.mxu0 0.0
  %748 = vmatpush1.msra.mxu0 0.0
  %749 = vmatprep.subr.mxu0 0.0
  %750 = vmatpush1.msra.mxu0 0.0
  %751 = vmatprep.mubr.f32.mxu0 0.0
  %752 = vmatmul.mubr.f32.gmra.mrb[0].mxu0 %v686
  %v753 = vpop.f32.mrb[0].mxu0
  %v754 = vadd.f32 0.0, %v753
  %v755 = vpop.f32.mrb[0].mxu0
  %v756 = vadd.f32 0.0, %v755
  %757 = vdwg.mxu0
  %758 = vmatprep.subr.mxu0 0.0
  %759 = vmatpush1.msra.mxu0 %v308
  %760 = vmatprep.subr.mxu0 0.0
  %761 = vmatpush1.msra.mxu0 %v311
  %762 = vmatprep.subr.mxu0 0.0
  %763 = vmatpush1.msra.mxu0 %v314
  %764 = vmatprep.subr.mxu0 0.0
  %765 = vmatpush1.msra.mxu0 %v317
  %766 = vmatprep.subr.mxu0 0.0
  %767 = vmatpush1.msra.mxu0 %v320
  %768 = vmatprep.subr.mxu0 0.0
  %769 = vmatpush1.msra.mxu0 %v323
  %770 = vmatprep.subr.mxu0 0.0
  %771 = vmatpush1.msra.mxu0 %v326
  %772 = vmatprep.subr.mxu0 0.0
  %773 = vmatpush1.msra.mxu0 %v329
  %774 = vmatprep.subr.mxu0 0.0
  %775 = vmatpush1.msra.mxu0 %v332
  %776 = vmatprep.subr.mxu0 0.0
  %777 = vmatpush1.msra.mxu0 %v335
  %778 = vmatprep.subr.mxu0 0.0
  %779 = vmatpush1.msra.mxu0 %v338
  %780 = vmatprep.subr.mxu0 0.0
  %781 = vmatpush1.msra.mxu0 %v341
  %782 = vmatprep.subr.mxu0 0.0
  %783 = vmatpush1.msra.mxu0 %v344
  %784 = vmatprep.subr.mxu0 0.0
  %785 = vmatpush1.msra.mxu0 %v347
  %786 = vmatprep.subr.mxu0 0.0
  %787 = vmatpush1.msra.mxu0 %v350
  %788 = vmatprep.subr.mxu0 0.0
  %789 = vmatpush1.msra.mxu0 %v353
  %790 = vmatprep.subr.mxu0 0.0
  %791 = vmatpush1.msra.mxu0 0.0
  %792 = vmatprep.subr.mxu0 0.0
  %793 = vmatpush1.msra.mxu0 0.0
  %794 = vmatprep.subr.mxu0 0.0
  %795 = vmatpush1.msra.mxu0 0.0
  %796 = vmatprep.subr.mxu0 0.0
  %797 = vmatpush1.msra.mxu0 0.0
  %798 = vmatprep.subr.mxu0 0.0
  %799 = vmatpush1.msra.mxu0 0.0
  %800 = vmatprep.subr.mxu0 0.0
  %801 = vmatpush1.msra.mxu0 0.0
  %802 = vmatprep.subr.mxu0 0.0
  %803 = vmatpush1.msra.mxu0 0.0
  %804 = vmatprep.subr.mxu0 0.0
  %805 = vmatpush1.msra.mxu0 0.0
  %806 = vmatprep.subr.mxu0 0.0
  %807 = vmatpush1.msra.mxu0 0.0
  %808 = vmatprep.subr.mxu0 0.0
  %809 = vmatpush1.msra.mxu0 0.0
  %810 = vmatprep.subr.mxu0 0.0
  %811 = vmatpush1.msra.mxu0 0.0
  %812 = vmatprep.subr.mxu0 0.0
  %813 = vmatpush1.msra.mxu0 0.0
  %814 = vmatprep.subr.mxu0 0.0
  %815 = vmatpush1.msra.mxu0 0.0
  %816 = vmatprep.subr.mxu0 0.0
  %817 = vmatpush1.msra.mxu0 0.0
  %818 = vmatprep.subr.mxu0 0.0
  %819 = vmatpush1.msra.mxu0 0.0
  %820 = vmatprep.subr.mxu0 0.0
  %821 = vmatpush1.msra.mxu0 0.0
  %822 = vmatprep.mubr.f32.mxu0 0.0
  %823 = vmatmul.mubr.f32.gmra.mrb[0].mxu0 %v686
  %v824 = vpop.f32.mrb[0].mxu0
  %v825 = vadd.f32 0.0, %v824
  %v826 = vpop.f32.mrb[0].mxu0
  %827 = vdwg.mxu0
  %v828 = vadd.f32 %v167, %v754
  %v829 = vadd.f32 %v169, %v756
  %v830 = vxor.u32 %v828, 2147483648
  %v831 = vxor.u32 %v829, 2147483648
  %v832 = vmul.f32 %v830, 1.442695
  %v833 = vpow.pop %v832
  %v834 = vmul.f32 %v831, 1.442695
  %v835 = vpow.pop %v834
  %v836 = vadd.f32 %v833, 1.0
  %v837 = vadd.f32 %v835, 1.0
  %v838 = vrcp.pop %v836
  %v839 = vmul.f32 1.0, %v838
  %v840 = vrcp.pop %v837
  %v841 = vmul.f32 1.0, %v840
  %v842 = vadd.f32 %v825, %v359
  %v843 = vmul.f32 %v839, %v842
  %v844 = vadd.f32 %v278, %v843
  %v845 = vtanh.pop %v844
  %v846 = vsub.f32 1.0, %v841
  %v847 = vmul.f32 %v846, %v845
  %v848 = vmul.f32 %v841, %v686
  %v849 = vadd.f32 %v847, %v848
  %850 = vmatprep.subr.mxu0 %v307
  %851 = vmatpush1.msra.mxu0 %v306
  %852 = vmatprep.subr.mxu0 %v310
  %853 = vmatpush1.msra.mxu0 %v309
  %854 = vmatprep.subr.mxu0 %v313
  %855 = vmatpush1.msra.mxu0 %v312
  %856 = vmatprep.subr.mxu0 %v316
  %857 = vmatpush1.msra.mxu0 %v315
  %858 = vmatprep.subr.mxu0 %v319
  %859 = vmatpush1.msra.mxu0 %v318
  %860 = vmatprep.subr.mxu0 %v322
  %861 = vmatpush1.msra.mxu0 %v321
  %862 = vmatprep.subr.mxu0 %v325
  %863 = vmatpush1.msra.mxu0 %v324
  %864 = vmatprep.subr.mxu0 %v328
  %865 = vmatpush1.msra.mxu0 %v327
  %866 = vmatprep.subr.mxu0 %v331
  %867 = vmatpush1.msra.mxu0 %v330
  %868 = vmatprep.subr.mxu0 %v334
  %869 = vmatpush1.msra.mxu0 %v333
  %870 = vmatprep.subr.mxu0 %v337
  %871 = vmatpush1.msra.mxu0 %v336
  %872 = vmatprep.subr.mxu0 %v340
  %873 = vmatpush1.msra.mxu0 %v339
  %874 = vmatprep.subr.mxu0 %v343
  %875 = vmatpush1.msra.mxu0 %v342
  %876 = vmatprep.subr.mxu0 %v346
  %877 = vmatpush1.msra.mxu0 %v345
  %878 = vmatprep.subr.mxu0 %v349
  %879 = vmatpush1.msra.mxu0 %v348
  %880 = vmatprep.subr.mxu0 %v352
  %881 = vmatpush1.msra.mxu0 %v351
  %882 = vmatprep.subr.mxu0 0.0
  %883 = vmatpush1.msra.mxu0 0.0
  %884 = vmatprep.subr.mxu0 0.0
  %885 = vmatpush1.msra.mxu0 0.0
  %886 = vmatprep.subr.mxu0 0.0
  %887 = vmatpush1.msra.mxu0 0.0
  %888 = vmatprep.subr.mxu0 0.0
  %889 = vmatpush1.msra.mxu0 0.0
  %890 = vmatprep.subr.mxu0 0.0
  %891 = vmatpush1.msra.mxu0 0.0
  %892 = vmatprep.subr.mxu0 0.0
  %893 = vmatpush1.msra.mxu0 0.0
  %894 = vmatprep.subr.mxu0 0.0
  %895 = vmatpush1.msra.mxu0 0.0
  %896 = vmatprep.subr.mxu0 0.0
  %897 = vmatpush1.msra.mxu0 0.0
  %898 = vmatprep.subr.mxu0 0.0
  %899 = vmatpush1.msra.mxu0 0.0
  %900 = vmatprep.subr.mxu0 0.0
  %901 = vmatpush1.msra.mxu0 0.0
  %902 = vmatprep.subr.mxu0 0.0
  %903 = vmatpush1.msra.mxu0 0.0
  %904 = vmatprep.subr.mxu0 0.0
  %905 = vmatpush1.msra.mxu0 0.0
  %906 = vmatprep.subr.mxu0 0.0
  %907 = vmatpush1.msra.mxu0 0.0
  %908 = vmatprep.subr.mxu0 0.0
  %909 = vmatpush1.msra.mxu0 0.0
  %910 = vmatprep.subr.mxu0 0.0
  %911 = vmatpush1.msra.mxu0 0.0
  %912 = vmatprep.subr.mxu0 0.0
  %913 = vmatpush1.msra.mxu0 0.0
  %914 = vmatprep.mubr.f32.mxu0 0.0
  %915 = vmatmul.mubr.f32.gmra.mrb[0].mxu0 %v849
  %v916 = vpop.f32.mrb[0].mxu0
  %v917 = vadd.f32 0.0, %v916
  %v918 = vpop.f32.mrb[0].mxu0
  %v919 = vadd.f32 0.0, %v918
  %920 = vdwg.mxu0
  %921 = vmatprep.subr.mxu0 0.0
  %922 = vmatpush1.msra.mxu0 %v308
  %923 = vmatprep.subr.mxu0 0.0
  %924 = vmatpush1.msra.mxu0 %v311
  %925 = vmatprep.subr.mxu0 0.0
  %926 = vmatpush1.msra.mxu0 %v314
  %927 = vmatprep.subr.mxu0 0.0
  %928 = vmatpush1.msra.mxu0 %v317
  %929 = vmatprep.subr.mxu0 0.0
  %930 = vmatpush1.msra.mxu0 %v320
  %931 = vmatprep.subr.mxu0 0.0
  %932 = vmatpush1.msra.mxu0 %v323
  %933 = vmatprep.subr.mxu0 0.0
  %934 = vmatpush1.msra.mxu0 %v326
  %935 = vmatprep.subr.mxu0 0.0
  %936 = vmatpush1.msra.mxu0 %v329
  %937 = vmatprep.subr.mxu0 0.0
  %938 = vmatpush1.msra.mxu0 %v332
  %939 = vmatprep.subr.mxu0 0.0
  %940 = vmatpush1.msra.mxu0 %v335
  %941 = vmatprep.subr.mxu0 0.0
  %942 = vmatpush1.msra.mxu0 %v338
  %943 = vmatprep.subr.mxu0 0.0
  %944 = vmatpush1.msra.mxu0 %v341
  %945 = vmatprep.subr.mxu0 0.0
  %946 = vmatpush1.msra.mxu0 %v344
  %947 = vmatprep.subr.mxu0 0.0
  %948 = vmatpush1.msra.mxu0 %v347
  %949 = vmatprep.subr.mxu0 0.0
  %950 = vmatpush1.msra.mxu0 %v350
  %951 = vmatprep.subr.mxu0 0.0
  %952 = vmatpush1.msra.mxu0 %v353
  %953 = vmatprep.subr.mxu0 0.0
  %954 = vmatpush1.msra.mxu0 0.0
  %955 = vmatprep.subr.mxu0 0.0
  %956 = vmatpush1.msra.mxu0 0.0
  %957 = vmatprep.subr.mxu0 0.0
  %958 = vmatpush1.msra.mxu0 0.0
  %959 = vmatprep.subr.mxu0 0.0
  %960 = vmatpush1.msra.mxu0 0.0
  %961 = vmatprep.subr.mxu0 0.0
  %962 = vmatpush1.msra.mxu0 0.0
  %963 = vmatprep.subr.mxu0 0.0
  %964 = vmatpush1.msra.mxu0 0.0
  %965 = vmatprep.subr.mxu0 0.0
  %966 = vmatpush1.msra.mxu0 0.0
  %967 = vmatprep.subr.mxu0 0.0
  %968 = vmatpush1.msra.mxu0 0.0
  %969 = vmatprep.subr.mxu0 0.0
  %970 = vmatpush1.msra.mxu0 0.0
  %971 = vmatprep.subr.mxu0 0.0
  %972 = vmatpush1.msra.mxu0 0.0
  %973 = vmatprep.subr.mxu0 0.0
  %974 = vmatpush1.msra.mxu0 0.0
  %975 = vmatprep.subr.mxu0 0.0
  %976 = vmatpush1.msra.mxu0 0.0
  %977 = vmatprep.subr.mxu0 0.0
  %978 = vmatpush1.msra.mxu0 0.0
  %979 = vmatprep.subr.mxu0 0.0
  %980 = vmatpush1.msra.mxu0 0.0
  %981 = vmatprep.subr.mxu0 0.0
  %982 = vmatpush1.msra.mxu0 0.0
  %983 = vmatprep.subr.mxu0 0.0
  %984 = vmatpush1.msra.mxu0 0.0
  %985 = vmatprep.mubr.f32.mxu0 0.0
  %986 = vmatmul.mubr.f32.gmra.mrb[0].mxu0 %v849
  %v987 = vpop.f32.mrb[0].mxu0
  %v988 = vadd.f32 0.0, %v987
  %v989 = vpop.f32.mrb[0].mxu0
  %990 = vdwg.mxu0
  %v991 = vadd.f32 %v173, %v917
  %v992 = vadd.f32 %v175, %v919
  %v993 = vxor.u32 %v991, 2147483648
  %v994 = vxor.u32 %v992, 2147483648
  %v995 = vmul.f32 %v993, 1.442695
  %v996 = vpow.pop %v995
  %v997 = vmul.f32 %v994, 1.442695
  %v998 = vpow.pop %v997
  %v999 = vadd.f32 %v996, 1.0
  %v1000 = vadd.f32 %v998, 1.0
  %v1001 = vrcp.pop %v999
  %v1002 = vmul.f32 1.0, %v1001
  %v1003 = vrcp.pop %v1000
  %v1004 = vmul.f32 1.0, %v1003
  %v1005 = vadd.f32 %v988, %v359
  %v1006 = vmul.f32 %v1002, %v1005
  %v1007 = vadd.f32 %v283, %v1006
  %v1008 = vtanh.pop %v1007
  %v1009 = vsub.f32 1.0, %v1004
  %v1010 = vmul.f32 %v1009, %v1008
  %v1011 = vmul.f32 %v1004, %v849
  %v1012 = vadd.f32 %v1010, %v1011
  %1013 = vmatprep.subr.mxu0 %v307
  %1014 = vmatpush1.msra.mxu0 %v306
  %1015 = vmatprep.subr.mxu0 %v310
  %1016 = vmatpush1.msra.mxu0 %v309
  %1017 = vmatprep.subr.mxu0 %v313
  %1018 = vmatpush1.msra.mxu0 %v312
  %1019 = vmatprep.subr.mxu0 %v316
  %1020 = vmatpush1.msra.mxu0 %v315
  %1021 = vmatprep.subr.mxu0 %v319
  %1022 = vmatpush1.msra.mxu0 %v318
  %1023 = vmatprep.subr.mxu0 %v322
  %1024 = vmatpush1.msra.mxu0 %v321
  %1025 = vmatprep.subr.mxu0 %v325
  %1026 = vmatpush1.msra.mxu0 %v324
  %1027 = vmatprep.subr.mxu0 %v328
  %1028 = vmatpush1.msra.mxu0 %v327
  %1029 = vmatprep.subr.mxu0 %v331
  %1030 = vmatpush1.msra.mxu0 %v330
  %1031 = vmatprep.subr.mxu0 %v334
  %1032 = vmatpush1.msra.mxu0 %v333
  %1033 = vmatprep.subr.mxu0 %v337
  %1034 = vmatpush1.msra.mxu0 %v336
  %1035 = vmatprep.subr.mxu0 %v340
  %1036 = vmatpush1.msra.mxu0 %v339
  %1037 = vmatprep.subr.mxu0 %v343
  %1038 = vmatpush1.msra.mxu0 %v342
  %1039 = vmatprep.subr.mxu0 %v346
  %1040 = vmatpush1.msra.mxu0 %v345
  %1041 = vmatprep.subr.mxu0 %v349
  %1042 = vmatpush1.msra.mxu0 %v348
  %1043 = vmatprep.subr.mxu0 %v352
  %1044 = vmatpush1.msra.mxu0 %v351
  %1045 = vmatprep.subr.mxu0 0.0
  %1046 = vmatpush1.msra.mxu0 0.0
  %1047 = vmatprep.subr.mxu0 0.0
  %1048 = vmatpush1.msra.mxu0 0.0
  %1049 = vmatprep.subr.mxu0 0.0
  %1050 = vmatpush1.msra.mxu0 0.0
  %1051 = vmatprep.subr.mxu0 0.0
  %1052 = vmatpush1.msra.mxu0 0.0
  %1053 = vmatprep.subr.mxu0 0.0
  %1054 = vmatpush1.msra.mxu0 0.0
  %1055 = vmatprep.subr.mxu0 0.0
  %1056 = vmatpush1.msra.mxu0 0.0
  %1057 = vmatprep.subr.mxu0 0.0
  %1058 = vmatpush1.msra.mxu0 0.0
  %1059 = vmatprep.subr.mxu0 0.0
  %1060 = vmatpush1.msra.mxu0 0.0
  %1061 = vmatprep.subr.mxu0 0.0
  %1062 = vmatpush1.msra.mxu0 0.0
  %1063 = vmatprep.subr.mxu0 0.0
  %1064 = vmatpush1.msra.mxu0 0.0
  %1065 = vmatprep.subr.mxu0 0.0
  %1066 = vmatpush1.msra.mxu0 0.0
  %1067 = vmatprep.subr.mxu0 0.0
  %1068 = vmatpush1.msra.mxu0 0.0
  %1069 = vmatprep.subr.mxu0 0.0
  %1070 = vmatpush1.msra.mxu0 0.0
  %1071 = vmatprep.subr.mxu0 0.0
  %1072 = vmatpush1.msra.mxu0 0.0
  %1073 = vmatprep.subr.mxu0 0.0
  %1074 = vmatpush1.msra.mxu0 0.0
  %1075 = vmatprep.subr.mxu0 0.0
  %1076 = vmatpush1.msra.mxu0 0.0
  %1077 = vmatprep.mubr.f32.mxu0 0.0
  %1078 = vmatmul.mubr.f32.gmra.mrb[0].mxu0 %v1012
  %v1079 = vpop.f32.mrb[0].mxu0
  %v1080 = vadd.f32 0.0, %v1079
  %v1081 = vpop.f32.mrb[0].mxu0
  %v1082 = vadd.f32 0.0, %v1081
  %1083 = vdwg.mxu0
  %1084 = vmatprep.subr.mxu0 0.0
  %1085 = vmatpush1.msra.mxu0 %v308
  %1086 = vmatprep.subr.mxu0 0.0
  %1087 = vmatpush1.msra.mxu0 %v311
  %1088 = vmatprep.subr.mxu0 0.0
  %1089 = vmatpush1.msra.mxu0 %v314
  %1090 = vmatprep.subr.mxu0 0.0
  %1091 = vmatpush1.msra.mxu0 %v317
  %1092 = vmatprep.subr.mxu0 0.0
  %1093 = vmatpush1.msra.mxu0 %v320
  %1094 = vmatprep.subr.mxu0 0.0
  %1095 = vmatpush1.msra.mxu0 %v323
  %1096 = vmatprep.subr.mxu0 0.0
  %1097 = vmatpush1.msra.mxu0 %v326
  %1098 = vmatprep.subr.mxu0 0.0
  %1099 = vmatpush1.msra.mxu0 %v329
  %1100 = vmatprep.subr.mxu0 0.0
  %1101 = vmatpush1.msra.mxu0 %v332
  %1102 = vmatprep.subr.mxu0 0.0
  %1103 = vmatpush1.msra.mxu0 %v335
  %1104 = vmatprep.subr.mxu0 0.0
  %1105 = vmatpush1.msra.mxu0 %v338
  %1106 = vmatprep.subr.mxu0 0.0
  %1107 = vmatpush1.msra.mxu0 %v341
  %1108 = vmatprep.subr.mxu0 0.0
  %1109 = vmatpush1.msra.mxu0 %v344
  %1110 = vmatprep.subr.mxu0 0.0
  %1111 = vmatpush1.msra.mxu0 %v347
  %1112 = vmatprep.subr.mxu0 0.0
  %1113 = vmatpush1.msra.mxu0 %v350
  %1114 = vmatprep.subr.mxu0 0.0
  %1115 = vmatpush1.msra.mxu0 %v353
  %1116 = vmatprep.subr.mxu0 0.0
  %1117 = vmatpush1.msra.mxu0 0.0
  %1118 = vmatprep.subr.mxu0 0.0
  %1119 = vmatpush1.msra.mxu0 0.0
  %1120 = vmatprep.subr.mxu0 0.0
  %1121 = vmatpush1.msra.mxu0 0.0
  %1122 = vmatprep.subr.mxu0 0.0
  %1123 = vmatpush1.msra.mxu0 0.0
  %1124 = vmatprep.subr.mxu0 0.0
  %1125 = vmatpush1.msra.mxu0 0.0
  %1126 = vmatprep.subr.mxu0 0.0
  %1127 = vmatpush1.msra.mxu0 0.0
  %1128 = vmatprep.subr.mxu0 0.0
  %1129 = vmatpush1.msra.mxu0 0.0
  %1130 = vmatprep.subr.mxu0 0.0
  %1131 = vmatpush1.msra.mxu0 0.0
  %1132 = vmatprep.subr.mxu0 0.0
  %1133 = vmatpush1.msra.mxu0 0.0
  %1134 = vmatprep.subr.mxu0 0.0
  %1135 = vmatpush1.msra.mxu0 0.0
  %1136 = vmatprep.subr.mxu0 0.0
  %1137 = vmatpush1.msra.mxu0 0.0
  %1138 = vmatprep.subr.mxu0 0.0
  %1139 = vmatpush1.msra.mxu0 0.0
  %1140 = vmatprep.subr.mxu0 0.0
  %1141 = vmatpush1.msra.mxu0 0.0
  %1142 = vmatprep.subr.mxu0 0.0
  %1143 = vmatpush1.msra.mxu0 0.0
  %1144 = vmatprep.subr.mxu0 0.0
  %1145 = vmatpush1.msra.mxu0 0.0
  %1146 = vmatprep.subr.mxu0 0.0
  %1147 = vmatpush1.msra.mxu0 0.0
  %1148 = vmatprep.mubr.f32.mxu0 0.0
  %1149 = vmatmul.mubr.f32.gmra.mrb[0].mxu0 %v1012
  %v1150 = vpop.f32.mrb[0].mxu0
  %v1151 = vadd.f32 0.0, %v1150
  %v1152 = vpop.f32.mrb[0].mxu0
  %1153 = vdwg.mxu0
  %v1154 = vadd.f32 %v179, %v1080
  %v1155 = vadd.f32 %v181, %v1082
  %v1156 = vxor.u32 %v1154, 2147483648
  %v1157 = vxor.u32 %v1155, 2147483648
  %v1158 = vmul.f32 %v1156, 1.442695
  %v1159 = vpow.pop %v1158
  %v1160 = vmul.f32 %v1157, 1.442695
  %v1161 = vpow.pop %v1160
  %v1162 = vadd.f32 %v1159, 1.0
  %v1163 = vadd.f32 %v1161, 1.0
  %v1164 = vrcp.pop %v1162
  %v1165 = vmul.f32 1.0, %v1164
  %v1166 = vrcp.pop %v1163
  %v1167 = vmul.f32 1.0, %v1166
  %v1168 = vadd.f32 %v1151, %v359
  %v1169 = vmul.f32 %v1165, %v1168
  %v1170 = vadd.f32 %v288, %v1169
  %v1171 = vtanh.pop %v1170
  %v1172 = vsub.f32 1.0, %v1167
  %v1173 = vmul.f32 %v1172, %v1171
  %v1174 = vmul.f32 %v1167, %v1012
  %v1175 = vadd.f32 %v1173, %v1174
  %1176 = vmatprep.subr.mxu0 %v307
  %1177 = vmatpush1.msra.mxu0 %v306
  %1178 = vmatprep.subr.mxu0 %v310
  %1179 = vmatpush1.msra.mxu0 %v309
  %1180 = vmatprep.subr.mxu0 %v313
  %1181 = vmatpush1.msra.mxu0 %v312
  %1182 = vmatprep.subr.mxu0 %v316
  %1183 = vmatpush1.msra.mxu0 %v315
  %1184 = vmatprep.subr.mxu0 %v319
  %1185 = vmatpush1.msra.mxu0 %v318
  %1186 = vmatprep.subr.mxu0 %v322
  %1187 = vmatpush1.msra.mxu0 %v321
  %1188 = vmatprep.subr.mxu0 %v325
  %1189 = vmatpush1.msra.mxu0 %v324
  %1190 = vmatprep.subr.mxu0 %v328
  %1191 = vmatpush1.msra.mxu0 %v327
  %1192 = vmatprep.subr.mxu0 %v331
  %1193 = vmatpush1.msra.mxu0 %v330
  %1194 = vmatprep.subr.mxu0 %v334
  %1195 = vmatpush1.msra.mxu0 %v333
  %1196 = vmatprep.subr.mxu0 %v337
  %1197 = vmatpush1.msra.mxu0 %v336
  %1198 = vmatprep.subr.mxu0 %v340
  %1199 = vmatpush1.msra.mxu0 %v339
  %1200 = vmatprep.subr.mxu0 %v343
  %1201 = vmatpush1.msra.mxu0 %v342
  %1202 = vmatprep.subr.mxu0 %v346
  %1203 = vmatpush1.msra.mxu0 %v345
  %1204 = vmatprep.subr.mxu0 %v349
  %1205 = vmatpush1.msra.mxu0 %v348
  %1206 = vmatprep.subr.mxu0 %v352
  %1207 = vmatpush1.msra.mxu0 %v351
  %1208 = vmatprep.subr.mxu0 0.0
  %1209 = vmatpush1.msra.mxu0 0.0
  %1210 = vmatprep.subr.mxu0 0.0
  %1211 = vmatpush1.msra.mxu0 0.0
  %1212 = vmatprep.subr.mxu0 0.0
  %1213 = vmatpush1.msra.mxu0 0.0
  %1214 = vmatprep.subr.mxu0 0.0
  %1215 = vmatpush1.msra.mxu0 0.0
  %1216 = vmatprep.subr.mxu0 0.0
  %1217 = vmatpush1.msra.mxu0 0.0
  %1218 = vmatprep.subr.mxu0 0.0
  %1219 = vmatpush1.msra.mxu0 0.0
  %1220 = vmatprep.subr.mxu0 0.0
  %1221 = vmatpush1.msra.mxu0 0.0
  %1222 = vmatprep.subr.mxu0 0.0
  %1223 = vmatpush1.msra.mxu0 0.0
  %1224 = vmatprep.subr.mxu0 0.0
  %1225 = vmatpush1.msra.mxu0 0.0
  %1226 = vmatprep.subr.mxu0 0.0
  %1227 = vmatpush1.msra.mxu0 0.0
  %1228 = vmatprep.subr.mxu0 0.0
  %1229 = vmatpush1.msra.mxu0 0.0
  %1230 = vmatprep.subr.mxu0 0.0
  %1231 = vmatpush1.msra.mxu0 0.0
  %1232 = vmatprep.subr.mxu0 0.0
  %1233 = vmatpush1.msra.mxu0 0.0
  %1234 = vmatprep.subr.mxu0 0.0
  %1235 = vmatpush1.msra.mxu0 0.0
  %1236 = vmatprep.subr.mxu0 0.0
  %1237 = vmatpush1.msra.mxu0 0.0
  %1238 = vmatprep.subr.mxu0 0.0
  %1239 = vmatpush1.msra.mxu0 0.0
  %1240 = vmatprep.mubr.f32.mxu0 0.0
  %1241 = vmatmul.mubr.f32.gmra.mrb[0].mxu0 %v1175
  %v1242 = vpop.f32.mrb[0].mxu0
  %v1243 = vadd.f32 0.0, %v1242
  %v1244 = vpop.f32.mrb[0].mxu0
  %v1245 = vadd.f32 0.0, %v1244
  %1246 = vdwg.mxu0
  %1247 = vmatprep.subr.mxu0 0.0
  %1248 = vmatpush1.msra.mxu0 %v308
  %1249 = vmatprep.subr.mxu0 0.0
  %1250 = vmatpush1.msra.mxu0 %v311
  %1251 = vmatprep.subr.mxu0 0.0
  %1252 = vmatpush1.msra.mxu0 %v314
  %1253 = vmatprep.subr.mxu0 0.0
  %1254 = vmatpush1.msra.mxu0 %v317
  %1255 = vmatprep.subr.mxu0 0.0
  %1256 = vmatpush1.msra.mxu0 %v320
  %1257 = vmatprep.subr.mxu0 0.0
  %1258 = vmatpush1.msra.mxu0 %v323
  %1259 = vmatprep.subr.mxu0 0.0
  %1260 = vmatpush1.msra.mxu0 %v326
  %1261 = vmatprep.subr.mxu0 0.0
  %1262 = vmatpush1.msra.mxu0 %v329
  %1263 = vmatprep.subr.mxu0 0.0
  %1264 = vmatpush1.msra.mxu0 %v332
  %1265 = vmatprep.subr.mxu0 0.0
  %1266 = vmatpush1.msra.mxu0 %v335
  %1267 = vmatprep.subr.mxu0 0.0
  %1268 = vmatpush1.msra.mxu0 %v338
  %1269 = vmatprep.subr.mxu0 0.0
  %1270 = vmatpush1.msra.mxu0 %v341
  %1271 = vmatprep.subr.mxu0 0.0
  %1272 = vmatpush1.msra.mxu0 %v344
  %1273 = vmatprep.subr.mxu0 0.0
  %1274 = vmatpush1.msra.mxu0 %v347
  %1275 = vmatprep.subr.mxu0 0.0
  %1276 = vmatpush1.msra.mxu0 %v350
  %1277 = vmatprep.subr.mxu0 0.0
  %1278 = vmatpush1.msra.mxu0 %v353
  %1279 = vmatprep.subr.mxu0 0.0
  %1280 = vmatpush1.msra.mxu0 0.0
  %1281 = vmatprep.subr.mxu0 0.0
  %1282 = vmatpush1.msra.mxu0 0.0
  %1283 = vmatprep.subr.mxu0 0.0
  %1284 = vmatpush1.msra.mxu0 0.0
  %1285 = vmatprep.subr.mxu0 0.0
  %1286 = vmatpush1.msra.mxu0 0.0
  %1287 = vmatprep.subr.mxu0 0.0
  %1288 = vmatpush1.msra.mxu0 0.0
  %1289 = vmatprep.subr.mxu0 0.0
  %1290 = vmatpush1.msra.mxu0 0.0
  %1291 = vmatprep.subr.mxu0 0.0
  %1292 = vmatpush1.msra.mxu0 0.0
  %1293 = vmatprep.subr.mxu0 0.0
  %1294 = vmatpush1.msra.mxu0 0.0
  %1295 = vmatprep.subr.mxu0 0.0
  %1296 = vmatpush1.msra.mxu0 0.0
  %1297 = vmatprep.subr.mxu0 0.0
  %1298 = vmatpush1.msra.mxu0 0.0
  %1299 = vmatprep.subr.mxu0 0.0
  %1300 = vmatpush1.msra.mxu0 0.0
  %1301 = vmatprep.subr.mxu0 0.0
  %1302 = vmatpush1.msra.mxu0 0.0
  %1303 = vmatprep.subr.mxu0 0.0
  %1304 = vmatpush1.msra.mxu0 0.0
  %1305 = vmatprep.subr.mxu0 0.0
  %1306 = vmatpush1.msra.mxu0 0.0
  %1307 = vmatprep.subr.mxu0 0.0
  %1308 = vmatpush1.msra.mxu0 0.0
  %1309 = vmatprep.subr.mxu0 0.0
  %1310 = vmatpush1.msra.mxu0 0.0
  %1311 = vmatprep.mubr.f32.mxu0 0.0
  %1312 = vmatmul.mubr.f32.gmra.mrb[0].mxu0 %v1175
  %v1313 = vpop.f32.mrb[0].mxu0
  %v1314 = vadd.f32 0.0, %v1313
  %v1315 = vpop.f32.mrb[0].mxu0
  %1316 = vdwg.mxu0
  %v1317 = vadd.f32 %v185, %v1243
  %v1318 = vadd.f32 %v187, %v1245
  %v1319 = vxor.u32 %v1317, 2147483648
  %v1320 = vxor.u32 %v1318, 2147483648
  %v1321 = vmul.f32 %v1319, 1.442695
  %v1322 = vpow.pop %v1321
  %v1323 = vmul.f32 %v1320, 1.442695
  %v1324 = vpow.pop %v1323
  %v1325 = vadd.f32 %v1322, 1.0
  %v1326 = vadd.f32 %v1324, 1.0
  %v1327 = vrcp.pop %v1325
  %v1328 = vmul.f32 1.0, %v1327
  %v1329 = vrcp.pop %v1326
  %v1330 = vmul.f32 1.0, %v1329
  %v1331 = vadd.f32 %v1314, %v359
  %v1332 = vmul.f32 %v1328, %v1331
  %v1333 = vadd.f32 %v293, %v1332
  %v1334 = vtanh.pop %v1333
  %v1335 = vsub.f32 1.0, %v1330
  %v1336 = vmul.f32 %v1335, %v1334
  %v1337 = vmul.f32 %v1330, %v1175
  %v1338 = vadd.f32 %v1336, %v1337
  %1339 = vmatprep.subr.mxu0 %v307
  %1340 = vmatpush1.msra.mxu0 %v306
  %1341 = vmatprep.subr.mxu0 %v310
  %1342 = vmatpush1.msra.mxu0 %v309
  %1343 = vmatprep.subr.mxu0 %v313
  %1344 = vmatpush1.msra.mxu0 %v312
  %1345 = vmatprep.subr.mxu0 %v316
  %1346 = vmatpush1.msra.mxu0 %v315
  %1347 = vmatprep.subr.mxu0 %v319
  %1348 = vmatpush1.msra.mxu0 %v318
  %1349 = vmatprep.subr.mxu0 %v322
  %1350 = vmatpush1.msra.mxu0 %v321
  %1351 = vmatprep.subr.mxu0 %v325
  %1352 = vmatpush1.msra.mxu0 %v324
  %1353 = vmatprep.subr.mxu0 %v328
  %1354 = vmatpush1.msra.mxu0 %v327
  %1355 = vmatprep.subr.mxu0 %v331
  %1356 = vmatpush1.msra.mxu0 %v330
  %1357 = vmatprep.subr.mxu0 %v334
  %1358 = vmatpush1.msra.mxu0 %v333
  %1359 = vmatprep.subr.mxu0 %v337
  %1360 = vmatpush1.msra.mxu0 %v336
  %1361 = vmatprep.subr.mxu0 %v340
  %1362 = vmatpush1.msra.mxu0 %v339
  %1363 = vmatprep.subr.mxu0 %v343
  %1364 = vmatpush1.msra.mxu0 %v342
  %1365 = vmatprep.subr.mxu0 %v346
  %1366 = vmatpush1.msra.mxu0 %v345
  %1367 = vmatprep.subr.mxu0 %v349
  %1368 = vmatpush1.msra.mxu0 %v348
  %1369 = vmatprep.subr.mxu0 %v352
  %1370 = vmatpush1.msra.mxu0 %v351
  %1371 = vmatprep.subr.mxu0 0.0
  %1372 = vmatpush1.msra.mxu0 0.0
  %1373 = vmatprep.subr.mxu0 0.0
  %1374 = vmatpush1.msra.mxu0 0.0
  %1375 = vmatprep.subr.mxu0 0.0
  %1376 = vmatpush1.msra.mxu0 0.0
  %1377 = vmatprep.subr.mxu0 0.0
  %1378 = vmatpush1.msra.mxu0 0.0
  %1379 = vmatprep.subr.mxu0 0.0
  %1380 = vmatpush1.msra.mxu0 0.0
  %1381 = vmatprep.subr.mxu0 0.0
  %1382 = vmatpush1.msra.mxu0 0.0
  %1383 = vmatprep.subr.mxu0 0.0
  %1384 = vmatpush1.msra.mxu0 0.0
  %1385 = vmatprep.subr.mxu0 0.0
  %1386 = vmatpush1.msra.mxu0 0.0
  %1387 = vmatprep.subr.mxu0 0.0
  %1388 = vmatpush1.msra.mxu0 0.0
  %1389 = vmatprep.subr.mxu0 0.0
  %1390 = vmatpush1.msra.mxu0 0.0
  %1391 = vmatprep.subr.mxu0 0.0
  %1392 = vmatpush1.msra.mxu0 0.0
  %1393 = vmatprep.subr.mxu0 0.0
  %1394 = vmatpush1.msra.mxu0 0.0
  %1395 = vmatprep.subr.mxu0 0.0
  %1396 = vmatpush1.msra.mxu0 0.0
  %1397 = vmatprep.subr.mxu0 0.0
  %1398 = vmatpush1.msra.mxu0 0.0
  %1399 = vmatprep.subr.mxu0 0.0
  %1400 = vmatpush1.msra.mxu0 0.0
  %1401 = vmatprep.subr.mxu0 0.0
  %1402 = vmatpush1.msra.mxu0 0.0
  %1403 = vmatprep.mubr.f32.mxu0 0.0
  %1404 = vmatmul.mubr.f32.gmra.mrb[0].mxu0 %v1338
  %v1405 = vpop.f32.mrb[0].mxu0
  %v1406 = vadd.f32 0.0, %v1405
  %v1407 = vpop.f32.mrb[0].mxu0
  %v1408 = vadd.f32 0.0, %v1407
  %1409 = vdwg.mxu0
  %1410 = vmatprep.subr.mxu0 0.0
  %1411 = vmatpush1.msra.mxu0 %v308
  %1412 = vmatprep.subr.mxu0 0.0
  %1413 = vmatpush1.msra.mxu0 %v311
  %1414 = vmatprep.subr.mxu0 0.0
  %1415 = vmatpush1.msra.mxu0 %v314
  %1416 = vmatprep.subr.mxu0 0.0
  %1417 = vmatpush1.msra.mxu0 %v317
  %1418 = vmatprep.subr.mxu0 0.0
  %1419 = vmatpush1.msra.mxu0 %v320
  %1420 = vmatprep.subr.mxu0 0.0
  %1421 = vmatpush1.msra.mxu0 %v323
  %1422 = vmatprep.subr.mxu0 0.0
  %1423 = vmatpush1.msra.mxu0 %v326
  %1424 = vmatprep.subr.mxu0 0.0
  %1425 = vmatpush1.msra.mxu0 %v329
  %1426 = vmatprep.subr.mxu0 0.0
  %1427 = vmatpush1.msra.mxu0 %v332
  %1428 = vmatprep.subr.mxu0 0.0
  %1429 = vmatpush1.msra.mxu0 %v335
  %1430 = vmatprep.subr.mxu0 0.0
  %1431 = vmatpush1.msra.mxu0 %v338
  %1432 = vmatprep.subr.mxu0 0.0
  %1433 = vmatpush1.msra.mxu0 %v341
  %1434 = vmatprep.subr.mxu0 0.0
  %1435 = vmatpush1.msra.mxu0 %v344
  %1436 = vmatprep.subr.mxu0 0.0
  %1437 = vmatpush1.msra.mxu0 %v347
  %1438 = vmatprep.subr.mxu0 0.0
  %1439 = vmatpush1.msra.mxu0 %v350
  %1440 = vmatprep.subr.mxu0 0.0
  %1441 = vmatpush1.msra.mxu0 %v353
  %1442 = vmatprep.subr.mxu0 0.0
  %1443 = vmatpush1.msra.mxu0 0.0
  %1444 = vmatprep.subr.mxu0 0.0
  %1445 = vmatpush1.msra.mxu0 0.0
  %1446 = vmatprep.subr.mxu0 0.0
  %1447 = vmatpush1.msra.mxu0 0.0
  %1448 = vmatprep.subr.mxu0 0.0
  %1449 = vmatpush1.msra.mxu0 0.0
  %1450 = vmatprep.subr.mxu0 0.0
  %1451 = vmatpush1.msra.mxu0 0.0
  %1452 = vmatprep.subr.mxu0 0.0
  %1453 = vmatpush1.msra.mxu0 0.0
  %1454 = vmatprep.subr.mxu0 0.0
  %1455 = vmatpush1.msra.mxu0 0.0
  %1456 = vmatprep.subr.mxu0 0.0
  %1457 = vmatpush1.msra.mxu0 0.0
  %1458 = vmatprep.subr.mxu0 0.0
  %1459 = vmatpush1.msra.mxu0 0.0
  %1460 = vmatprep.subr.mxu0 0.0
  %1461 = vmatpush1.msra.mxu0 0.0
  %1462 = vmatprep.subr.mxu0 0.0
  %1463 = vmatpush1.msra.mxu0 0.0
  %1464 = vmatprep.subr.mxu0 0.0
  %1465 = vmatpush1.msra.mxu0 0.0
  %1466 = vmatprep.subr.mxu0 0.0
  %1467 = vmatpush1.msra.mxu0 0.0
  %1468 = vmatprep.subr.mxu0 0.0
  %1469 = vmatpush1.msra.mxu0 0.0
  %1470 = vmatprep.subr.mxu0 0.0
  %1471 = vmatpush1.msra.mxu0 0.0
  %1472 = vmatprep.subr.mxu0 0.0
  %1473 = vmatpush1.msra.mxu0 0.0
  %1474 = vmatprep.mubr.f32.mxu0 0.0
  %1475 = vmatmul.mubr.f32.gmra.mrb[0].mxu0 %v1338
  %v1476 = vpop.f32.mrb[0].mxu0
  %v1477 = vadd.f32 0.0, %v1476
  %v1478 = vpop.f32.mrb[0].mxu0
  %1479 = vdwg.mxu0
  %v1480 = vadd.f32 %v191, %v1406
  %v1481 = vadd.f32 %v193, %v1408
  %v1482 = vxor.u32 %v1480, 2147483648
  %v1483 = vxor.u32 %v1481, 2147483648
  %v1484 = vmul.f32 %v1482, 1.442695
  %v1485 = vpow.pop %v1484
  %v1486 = vmul.f32 %v1483, 1.442695
  %v1487 = vpow.pop %v1486
  %v1488 = vadd.f32 %v1485, 1.0
  %v1489 = vadd.f32 %v1487, 1.0
  %v1490 = vrcp.pop %v1488
  %v1491 = vmul.f32 1.0, %v1490
  %v1492 = vrcp.pop %v1489
  %v1493 = vmul.f32 1.0, %v1492
  %v1494 = vadd.f32 %v1477, %v359
  %v1495 = vmul.f32 %v1491, %v1494
  %v1496 = vadd.f32 %v298, %v1495
  %v1497 = vtanh.pop %v1496
  %v1498 = vsub.f32 1.0, %v1493
  %v1499 = vmul.f32 %v1498, %v1497
  %v1500 = vmul.f32 %v1493, %v1338
  %v1501 = vadd.f32 %v1499, %v1500
  %1502 = vmatprep.subr.mxu0 %v307
  %1503 = vmatpush1.msra.mxu0 %v306
  %1504 = vmatprep.subr.mxu0 %v310
  %1505 = vmatpush1.msra.mxu0 %v309
  %1506 = vmatprep.subr.mxu0 %v313
  %1507 = vmatpush1.msra.mxu0 %v312
  %1508 = vmatprep.subr.mxu0 %v316
  %1509 = vmatpush1.msra.mxu0 %v315
  %1510 = vmatprep.subr.mxu0 %v319
  %1511 = vmatpush1.msra.mxu0 %v318
  %1512 = vmatprep.subr.mxu0 %v322
  %1513 = vmatpush1.msra.mxu0 %v321
  %1514 = vmatprep.subr.mxu0 %v325
  %1515 = vmatpush1.msra.mxu0 %v324
  %1516 = vmatprep.subr.mxu0 %v328
  %1517 = vmatpush1.msra.mxu0 %v327
  %1518 = vmatprep.subr.mxu0 %v331
  %1519 = vmatpush1.msra.mxu0 %v330
  %1520 = vmatprep.subr.mxu0 %v334
  %1521 = vmatpush1.msra.mxu0 %v333
  %1522 = vmatprep.subr.mxu0 %v337
  %1523 = vmatpush1.msra.mxu0 %v336
  %1524 = vmatprep.subr.mxu0 %v340
  %1525 = vmatpush1.msra.mxu0 %v339
  %1526 = vmatprep.subr.mxu0 %v343
  %1527 = vmatpush1.msra.mxu0 %v342
  %1528 = vmatprep.subr.mxu0 %v346
  %1529 = vmatpush1.msra.mxu0 %v345
  %1530 = vmatprep.subr.mxu0 %v349
  %1531 = vmatpush1.msra.mxu0 %v348
  %1532 = vmatprep.subr.mxu0 %v352
  %1533 = vmatpush1.msra.mxu0 %v351
  %1534 = vmatprep.subr.mxu0 0.0
  %1535 = vmatpush1.msra.mxu0 0.0
  %1536 = vmatprep.subr.mxu0 0.0
  %1537 = vmatpush1.msra.mxu0 0.0
  %1538 = vmatprep.subr.mxu0 0.0
  %1539 = vmatpush1.msra.mxu0 0.0
  %1540 = vmatprep.subr.mxu0 0.0
  %1541 = vmatpush1.msra.mxu0 0.0
  %1542 = vmatprep.subr.mxu0 0.0
  %1543 = vmatpush1.msra.mxu0 0.0
  %1544 = vmatprep.subr.mxu0 0.0
  %1545 = vmatpush1.msra.mxu0 0.0
  %1546 = vmatprep.subr.mxu0 0.0
  %1547 = vmatpush1.msra.mxu0 0.0
  %1548 = vmatprep.subr.mxu0 0.0
  %1549 = vmatpush1.msra.mxu0 0.0
  %1550 = vmatprep.subr.mxu0 0.0
  %1551 = vmatpush1.msra.mxu0 0.0
  %1552 = vmatprep.subr.mxu0 0.0
  %1553 = vmatpush1.msra.mxu0 0.0
  %1554 = vmatprep.subr.mxu0 0.0
  %1555 = vmatpush1.msra.mxu0 0.0
  %1556 = vmatprep.subr.mxu0 0.0
  %1557 = vmatpush1.msra.mxu0 0.0
  %1558 = vmatprep.subr.mxu0 0.0
  %1559 = vmatpush1.msra.mxu0 0.0
  %1560 = vmatprep.subr.mxu0 0.0
  %1561 = vmatpush1.msra.mxu0 0.0
  %1562 = vmatprep.subr.mxu0 0.0
  %1563 = vmatpush1.msra.mxu0 0.0
  %1564 = vmatprep.subr.mxu0 0.0
  %1565 = vmatpush1.msra.mxu0 0.0
  %1566 = vmatprep.mubr.f32.mxu0 0.0
  %1567 = vmatmul.mubr.f32.gmra.mrb[0].mxu0 %v1501
  %v1568 = vpop.f32.mrb[0].mxu0
  %v1569 = vadd.f32 0.0, %v1568
  %v1570 = vpop.f32.mrb[0].mxu0
  %v1571 = vadd.f32 0.0, %v1570
  %1572 = vdwg.mxu0
  %1573 = vmatprep.subr.mxu0 0.0
  %1574 = vmatpush1.msra.mxu0 %v308
  %1575 = vmatprep.subr.mxu0 0.0
  %1576 = vmatpush1.msra.mxu0 %v311
  %1577 = vmatprep.subr.mxu0 0.0
  %1578 = vmatpush1.msra.mxu0 %v314
  %1579 = vmatprep.subr.mxu0 0.0
  %1580 = vmatpush1.msra.mxu0 %v317
  %1581 = vmatprep.subr.mxu0 0.0
  %1582 = vmatpush1.msra.mxu0 %v320
  %1583 = vmatprep.subr.mxu0 0.0
  %1584 = vmatpush1.msra.mxu0 %v323
  %1585 = vmatprep.subr.mxu0 0.0
  %1586 = vmatpush1.msra.mxu0 %v326
  %1587 = vmatprep.subr.mxu0 0.0
  %1588 = vmatpush1.msra.mxu0 %v329
  %1589 = vmatprep.subr.mxu0 0.0
  %1590 = vmatpush1.msra.mxu0 %v332
  %1591 = vmatprep.subr.mxu0 0.0
  %1592 = vmatpush1.msra.mxu0 %v335
  %1593 = vmatprep.subr.mxu0 0.0
  %1594 = vmatpush1.msra.mxu0 %v338
  %1595 = vmatprep.subr.mxu0 0.0
  %1596 = vmatpush1.msra.mxu0 %v341
  %1597 = vmatprep.subr.mxu0 0.0
  %1598 = vmatpush1.msra.mxu0 %v344
  %1599 = vmatprep.subr.mxu0 0.0
  %1600 = vmatpush1.msra.mxu0 %v347
  %1601 = vmatprep.subr.mxu0 0.0
  %1602 = vmatpush1.msra.mxu0 %v350
  %1603 = vmatprep.subr.mxu0 0.0
  %1604 = vmatpush1.msra.mxu0 %v353
  %1605 = vmatprep.subr.mxu0 0.0
  %1606 = vmatpush1.msra.mxu0 0.0
  %1607 = vmatprep.subr.mxu0 0.0
  %1608 = vmatpush1.msra.mxu0 0.0
  %1609 = vmatprep.subr.mxu0 0.0
  %1610 = vmatpush1.msra.mxu0 0.0
  %1611 = vmatprep.subr.mxu0 0.0
  %1612 = vmatpush1.msra.mxu0 0.0
  %1613 = vmatprep.subr.mxu0 0.0
  %1614 = vmatpush1.msra.mxu0 0.0
  %1615 = vmatprep.subr.mxu0 0.0
  %1616 = vmatpush1.msra.mxu0 0.0
  %1617 = vmatprep.subr.mxu0 0.0
  %1618 = vmatpush1.msra.mxu0 0.0
  %1619 = vmatprep.subr.mxu0 0.0
  %1620 = vmatpush1.msra.mxu0 0.0
  %1621 = vmatprep.subr.mxu0 0.0
  %1622 = vmatpush1.msra.mxu0 0.0
  %1623 = vmatprep.subr.mxu0 0.0
  %1624 = vmatpush1.msra.mxu0 0.0
  %1625 = vmatprep.subr.mxu0 0.0
  %1626 = vmatpush1.msra.mxu0 0.0
  %1627 = vmatprep.subr.mxu0 0.0
  %1628 = vmatpush1.msra.mxu0 0.0
  %1629 = vmatprep.subr.mxu0 0.0
  %1630 = vmatpush1.msra.mxu0 0.0
  %1631 = vmatprep.subr.mxu0 0.0
  %1632 = vmatpush1.msra.mxu0 0.0
  %1633 = vmatprep.subr.mxu0 0.0
  %1634 = vmatpush1.msra.mxu0 0.0
  %1635 = vmatprep.subr.mxu0 0.0
  %1636 = vmatpush1.msra.mxu0 0.0
  %1637 = vmatprep.mubr.f32.mxu0 0.0
  %1638 = vmatmul.mubr.f32.gmra.mrb[0].mxu0 %v1501
  %v1639 = vpop.f32.mrb[0].mxu0
  %v1640 = vadd.f32 0.0, %v1639
  %v1641 = vpop.f32.mrb[0].mxu0
  %1642 = vdwg.mxu0
  %v1643 = vadd.f32 %v197, %v1569
  %v1644 = vadd.f32 %v199, %v1571
  %v1645 = vxor.u32 %v1643, 2147483648
  %v1646 = vxor.u32 %v1644, 2147483648
  %v1647 = vmul.f32 %v1645, 1.442695
  %v1648 = vpow.pop %v1647
  %v1649 = vmul.f32 %v1646, 1.442695
  %v1650 = vpow.pop %v1649
  %v1651 = vadd.f32 %v1648, 1.0
  %v1652 = vadd.f32 %v1650, 1.0
  %v1653 = vrcp.pop %v1651
  %v1654 = vmul.f32 1.0, %v1653
  %v1655 = vrcp.pop %v1652
  %v1656 = vmul.f32 1.0, %v1655
  %v1657 = vadd.f32 %v1640, %v359
  %v1658 = vmul.f32 %v1654, %v1657
  %v1659 = vadd.f32 %v303, %v1658
  %v1660 = vtanh.pop %v1659
  %v1661 = vsub.f32 1.0, %v1656
  %v1662 = vmul.f32 %v1661, %v1660
  %v1663 = vmul.f32 %v1656, %v1501
  %v1664 = vadd.f32 %v1662, %v1663
  %v1665 = vld [vmem:[%s5] sm:$0xff]
  %v1666 = vld [vmem:[%s5 + $0x8] sm:$0xff]
  %v1667 = vld [vmem:[%s5 + $0x10] sm:$0xff]
  %v1668 = vld [vmem:[%s5 + $0x18] sm:$0xff]
  %v1669 = vld [vmem:[%s5 + $0x20] sm:$0xff]
  %v1670 = vld [vmem:[%s5 + $0x28] sm:$0xff]
  %v1671 = vld [vmem:[%s5 + $0x30] sm:$0xff]
  %v1672 = vld [vmem:[%s5 + $0x38] sm:$0xff]
  %v1673 = vld [vmem:[%s5 + $0x40] sm:$0xff]
  %v1674 = vld [vmem:[%s5 + $0x48] sm:$0xff]
  %v1675 = vld [vmem:[%s5 + $0x50] sm:$0xff]
  %v1676 = vld [vmem:[%s5 + $0x58] sm:$0xff]
  %v1677 = vld [vmem:[%s5 + $0x60] sm:$0xff]
  %v1678 = vld [vmem:[%s5 + $0x68] sm:$0xff]
  %v1679 = vld [vmem:[%s5 + $0x70] sm:$0xff]
  %v1680 = vld [vmem:[%s5 + $0x78] sm:$0xff]
  %v1681 = vld [vmem:[%s6] sm:$0x1]
  %v1683 = vlaneseq
  %v1684 = vshrl.u32 %v1683, 7
  %v1685 = vsub.s32 0, %v1684
  %v1686 = vrot.slane %v1681, %v1685
  %1688 = vmatprep.subr.mxu0 0.0
  %1689 = vmatpush1.msra.mxu0 %v1665
  %1690 = vmatprep.subr.mxu0 0.0
  %1691 = vmatpush1.msra.mxu0 %v1666
  %1692 = vmatprep.subr.mxu0 0.0
  %1693 = vmatpush1.msra.mxu0 %v1667
  %1694 = vmatprep.subr.mxu0 0.0
  %1695 = vmatpush1.msra.mxu0 %v1668
  %1696 = vmatprep.subr.mxu0 0.0
  %1697 = vmatpush1.msra.mxu0 %v1669
  %1698 = vmatprep.subr.mxu0 0.0
  %1699 = vmatpush1.msra.mxu0 %v1670
  %1700 = vmatprep.subr.mxu0 0.0
  %1701 = vmatpush1.msra.mxu0 %v1671
  %1702 = vmatprep.subr.mxu0 0.0
  %1703 = vmatpush1.msra.mxu0 %v1672
  %1704 = vmatprep.subr.mxu0 0.0
  %1705 = vmatpush1.msra.mxu0 %v1673
  %1706 = vmatprep.subr.mxu0 0.0
  %1707 = vmatpush1.msra.mxu0 %v1674
  %1708 = vmatprep.subr.mxu0 0.0
  %1709 = vmatpush1.msra.mxu0 %v1675
  %1710 = vmatprep.subr.mxu0 0.0
  %1711 = vmatpush1.msra.mxu0 %v1676
  %1712 = vmatprep.subr.mxu0 0.0
  %1713 = vmatpush1.msra.mxu0 %v1677
  %1714 = vmatprep.subr.mxu0 0.0
  %1715 = vmatpush1.msra.mxu0 %v1678
  %1716 = vmatprep.subr.mxu0 0.0
  %1717 = vmatpush1.msra.mxu0 %v1679
  %1718 = vmatprep.subr.mxu0 0.0
  %1719 = vmatpush1.msra.mxu0 %v1680
  %1720 = vmatprep.subr.mxu0 0.0
  %1721 = vmatpush1.msra.mxu0 0.0
  %1722 = vmatprep.subr.mxu0 0.0
  %1723 = vmatpush1.msra.mxu0 0.0
  %1724 = vmatprep.subr.mxu0 0.0
  %1725 = vmatpush1.msra.mxu0 0.0
  %1726 = vmatprep.subr.mxu0 0.0
  %1727 = vmatpush1.msra.mxu0 0.0
  %1728 = vmatprep.subr.mxu0 0.0
  %1729 = vmatpush1.msra.mxu0 0.0
  %1730 = vmatprep.subr.mxu0 0.0
  %1731 = vmatpush1.msra.mxu0 0.0
  %1732 = vmatprep.subr.mxu0 0.0
  %1733 = vmatpush1.msra.mxu0 0.0
  %1734 = vmatprep.subr.mxu0 0.0
  %1735 = vmatpush1.msra.mxu0 0.0
  %1736 = vmatprep.subr.mxu0 0.0
  %1737 = vmatpush1.msra.mxu0 0.0
  %1738 = vmatprep.subr.mxu0 0.0
  %1739 = vmatpush1.msra.mxu0 0.0
  %1740 = vmatprep.subr.mxu0 0.0
  %1741 = vmatpush1.msra.mxu0 0.0
  %1742 = vmatprep.subr.mxu0 0.0
  %1743 = vmatpush1.msra.mxu0 0.0
  %1744 = vmatprep.subr.mxu0 0.0
  %1745 = vmatpush1.msra.mxu0 0.0
  %1746 = vmatprep.subr.mxu0 0.0
  %1747 = vmatpush1.msra.mxu0 0.0
  %1748 = vmatprep.subr.mxu0 0.0
  %1749 = vmatpush1.msra.mxu0 0.0
  %1750 = vmatprep.subr.mxu0 0.0
  %1751 = vmatpush1.msra.mxu0 0.0
  %1752 = vmatprep.mubr.f32.mxu0 0.0
  %1753 = vmatmul.mubr.f32.gmra.mrb[0].mxu0 %v1664
  %v1754 = vpop.f32.mrb[0].mxu0
  %v1755 = vadd.f32 %v1686, %v1754
  %v1756 = vpop.f32.mrb[0].mxu0
  %1757 = vdwg.mxu0
  %v1758 = vmax.f32 %v1755, 0.0
  %v1759 = vld [vmem:[%s7] sm:$0xff]
  %v1760 = vld [vmem:[%s7 + $0x8] sm:$0xff]
  %v1761 = vld [vmem:[%s7 + $0x10] sm:$0xff]
  %v1762 = vld [vmem:[%s7 + $0x18] sm:$0xff]
  %v1763 = vld [vmem:[%s7 + $0x20] sm:$0xff]
  %v1764 = vld [vmem:[%s7 + $0x28] sm:$0xff]
  %v1765 = vld [vmem:[%s7 + $0x30] sm:$0xff]
  %v1766 = vld [vmem:[%s7 + $0x38] sm:$0xff]
  %v1767 = vld [vmem:[%s7 + $0x40] sm:$0xff]
  %v1768 = vld [vmem:[%s7 + $0x48] sm:$0xff]
  %v1769 = vld [vmem:[%s7 + $0x50] sm:$0xff]
  %v1770 = vld [vmem:[%s7 + $0x58] sm:$0xff]
  %v1771 = vld [vmem:[%s7 + $0x60] sm:$0xff]
  %v1772 = vld [vmem:[%s7 + $0x68] sm:$0xff]
  %v1773 = vld [vmem:[%s7 + $0x70] sm:$0xff]
  %v1774 = vld [vmem:[%s7 + $0x78] sm:$0xff]
  %v1775 = vld [vmem:[%s8] sm:$0x1]
  %v1777 = vlaneseq
  %v1778 = vshrl.u32 %v1777, 7
  %v1779 = vsub.s32 0, %v1778
  %v1780 = vrot.slane %v1775, %v1779
  %1782 = vmatprep.subr.mxu0 0.0
  %1783 = vmatpush1.msra.mxu0 %v1759
  %1784 = vmatprep.subr.mxu0 0.0
  %1785 = vmatpush1.msra.mxu0 %v1760
  %1786 = vmatprep.subr.mxu0 0.0
  %1787 = vmatpush1.msra.mxu0 %v1761
  %1788 = vmatprep.subr.mxu0 0.0
  %1789 = vmatpush1.msra.mxu0 %v1762
  %1790 = vmatprep.subr.mxu0 0.0
  %1791 = vmatpush1.msra.mxu0 %v1763
  %1792 = vmatprep.subr.mxu0 0.0
  %1793 = vmatpush1.msra.mxu0 %v1764
  %1794 = vmatprep.subr.mxu0 0.0
  %1795 = vmatpush1.msra.mxu0 %v1765
  %1796 = vmatprep.subr.mxu0 0.0
  %1797 = vmatpush1.msra.mxu0 %v1766
  %1798 = vmatprep.subr.mxu0 0.0
  %1799 = vmatpush1.msra.mxu0 %v1767
  %1800 = vmatprep.subr.mxu0 0.0
  %1801 = vmatpush1.msra.mxu0 %v1768
  %1802 = vmatprep.subr.mxu0 0.0
  %1803 = vmatpush1.msra.mxu0 %v1769
  %1804 = vmatprep.subr.mxu0 0.0
  %1805 = vmatpush1.msra.mxu0 %v1770
  %1806 = vmatprep.subr.mxu0 0.0
  %1807 = vmatpush1.msra.mxu0 %v1771
  %1808 = vmatprep.subr.mxu0 0.0
  %1809 = vmatpush1.msra.mxu0 %v1772
  %1810 = vmatprep.subr.mxu0 0.0
  %1811 = vmatpush1.msra.mxu0 %v1773
  %1812 = vmatprep.subr.mxu0 0.0
  %1813 = vmatpush1.msra.mxu0 %v1774
  %1814 = vmatprep.subr.mxu0 0.0
  %1815 = vmatpush1.msra.mxu0 0.0
  %1816 = vmatprep.subr.mxu0 0.0
  %1817 = vmatpush1.msra.mxu0 0.0
  %1818 = vmatprep.subr.mxu0 0.0
  %1819 = vmatpush1.msra.mxu0 0.0
  %1820 = vmatprep.subr.mxu0 0.0
  %1821 = vmatpush1.msra.mxu0 0.0
  %1822 = vmatprep.subr.mxu0 0.0
  %1823 = vmatpush1.msra.mxu0 0.0
  %1824 = vmatprep.subr.mxu0 0.0
  %1825 = vmatpush1.msra.mxu0 0.0
  %1826 = vmatprep.subr.mxu0 0.0
  %1827 = vmatpush1.msra.mxu0 0.0
  %1828 = vmatprep.subr.mxu0 0.0
  %1829 = vmatpush1.msra.mxu0 0.0
  %1830 = vmatprep.subr.mxu0 0.0
  %1831 = vmatpush1.msra.mxu0 0.0
  %1832 = vmatprep.subr.mxu0 0.0
  %1833 = vmatpush1.msra.mxu0 0.0
  %1834 = vmatprep.subr.mxu0 0.0
  %1835 = vmatpush1.msra.mxu0 0.0
  %1836 = vmatprep.subr.mxu0 0.0
  %1837 = vmatpush1.msra.mxu0 0.0
  %1838 = vmatprep.subr.mxu0 0.0
  %1839 = vmatpush1.msra.mxu0 0.0
  %1840 = vmatprep.subr.mxu0 0.0
  %1841 = vmatpush1.msra.mxu0 0.0
  %1842 = vmatprep.subr.mxu0 0.0
  %1843 = vmatpush1.msra.mxu0 0.0
  %1844 = vmatprep.subr.mxu0 0.0
  %1845 = vmatpush1.msra.mxu0 0.0
  %1846 = vmatprep.mubr.f32.mxu0 0.0
  %1847 = vmatmul.mubr.f32.gmra.mrb[0].mxu0 %v1758
  %v1848 = vpop.f32.mrb[0].mxu0
  %v1849 = vadd.f32 %v1780, %v1848
  %v1850 = vpop.f32.mrb[0].mxu0
  %1851 = vdwg.mxu0
  %v1852 = vtanh.pop %v1849
  %v1853 = vmul.f32 %v1852, 2.0
  %1854 = vst [vmem:[%s9] sm:$0xff] %v1853
  // Predicated region
  $region38: #{actor_forward.1} parent=0 // pred_check
    _
  $region39: #{actor_forward.1} parent=0 // pred_check_branch
    %1856 = sbr.rel (0) target = $region41
  $region40: #{actor_forward.1} parent=0 // pred_region
    _
  $region41: #{actor_forward.1} parent=0 // pred_fallthru
    _
  // Predicated region
  $region42: #{actor_forward.1} parent=0 // pred_check
    _
  $region43: #{actor_forward.1} parent=0 // pred_check_branch
    %1858 = sbr.rel (0) target = $region45
  $region44: #{actor_forward.1} parent=0 // pred_region
    _
  $region45: #{actor_forward.1} parent=0 // pred_fallthru
    _

</llo_original>
